<compile_context>
chip_gen: v6e
topology: v6e:2x2x1
jax: 0.10.0
libtpu: 0.0.40
codegen_flags: <defaults>
</compile_context>

<pallas_src>
import numpy as np
import jax
import jax.numpy as jnp
from jax import lax
from jax.experimental import pallas as pl
from jax.experimental.pallas import tpu as pltpu

CNUM = 64

# ConvTranspose2d(1,1,4,stride=2,pad=1) phase taps:
# HR row 2*i + r takes kernel row `ky` applied to padded-LR row (py + i)
# (padded-LR row p == LR row p-1).
_DECONV_TAPS = {0: ((1, 1), (3, 0)), 1: ((0, 2), (2, 1))}


def upsample_filt(size):
    factor = (size + 1) // 2
    center = factor - 1 if size % 2 == 1 else factor - 0.5
    og = np.ogrid[:size, :size]
    return ((1 - abs(og[0] - center) / factor) *
            (1 - abs(og[1] - center) / factor)).astype(np.float32)


def _interleave_mats(W, TH_LR):
    """Host-built one-hot interleave matrices (stay VMEM-resident in-kernel)."""
    W2, TH2 = 2 * W, 2 * TH_LR
    S0 = np.zeros((W, W2), np.float32)
    S1 = np.zeros((W, W2), np.float32)
    S0[np.arange(W), 2 * np.arange(W)] = 1.0          # cols 2j   <- col j
    S1[np.arange(W), 2 * np.arange(W) + 1] = 1.0      # cols 2j+1 <- col j
    R0 = np.zeros((TH2, TH_LR), np.float32)
    R1 = np.zeros((TH2, TH_LR), np.float32)
    R0[2 * np.arange(TH_LR), np.arange(TH_LR)] = 1.0  # rows 2i   <- row i
    R1[2 * np.arange(TH_LR) + 1, np.arange(TH_LR)] = 1.0
    return (jnp.asarray(S0), jnp.asarray(S1), jnp.asarray(R0), jnp.asarray(R1))


# ----------------------------------------------------------------------------
# Fused kernel.  Grid = (N, HR-row tiles); one HR row tile per step.
# ----------------------------------------------------------------------------
def _image_reconstruction_kernel(lrpad_ref, f_ref, ftop_ref, fbot_ref,
                                 wR_ref, s0_ref, s1_ref, r0_ref, r1_ref,
                                 wT_ref, bT_ref, bR_ref, o_ref, tpad_ref):
    # lrpad_ref: (1, H+2, W+2)        full padded LR image (tiny, resident per n)
    # f_ref    : (1, 64, TH2*W2)      this tile's feature rows, NCHW, lane-flat
    # ftop_ref : (1, 64, hrows*W2)    block just above the tile (row halo)
    # fbot_ref : (1, 64, hrows*W2)    block just below the tile (row halo)
    # wR_ref   : (9, 64)              conv_R weights, tap-major (t = 3*dy + dx)
    # s0/s1    : (W, W2)              column-interleave one-hots
    # r0/r1    : (TH2, TH_LR)         row-interleave one-hots (per-tile K)
    # wT/bT/bR : SMEM scalars         convt_I weights (4,4) + biases
    # o_ref    : (1, TH2, W2)         HR output tile (W2 lane-dense)
    # tpad_ref : (9, (TH2+4)*W2)      VMEM scratch: row-padded conv_R tap maps
    f32 = jnp.float32
    TH2, W2 = o_ref.shape[1], o_ref.shape[2]
    L = TH2 * W2
    TH_LR = TH2 // 2
    W = s0_ref.shape[0]
    t_idx = pl.program_id(1)
    n_tiles = pl.num_programs(1)

    # ---- conv_R: 64 -> 1, 3x3 "same" ---------------------------------------
    # Channel contraction on the MXU over the lane-flattened spatial block:
    #   T[t, y*W2 + x] = sum_c wR[t, c] * F[c, y, x]          (9 tap maps)
    wR = wR_ref[...]
    T_main = jnp.dot(wR, f_ref[0], preferred_element_type=f32)        # (9, L)
    halo_lanes = ftop_ref.shape[2]
    top_row = ftop_ref[0, :, halo_lanes - W2:halo_lanes]               # (64, W2)
    bot_row = fbot_ref[0, :, 0:W2]                                     # (64, W2)
    T_top = jnp.dot(wR, top_row, preferred_element_type=f32)          # (9, W2)
    T_bot = jnp.dot(wR, bot_row, preferred_element_type=f32)
    T_top = jnp.where(t_idx > 0, T_top, 0.0)            # image top border
    T_bot = jnp.where(t_idx < n_tiles - 1, T_bot, 0.0)  # image bottom border

    # Row-padded tap-map scratch, flattened rows of width W2 (written once):
    #   [0, W2)                 never written (reads masked)
    #   [W2, 2*W2)              halo row above the tile
    #   [2*W2, (TH2+2)*W2)      this tile's rows
    #   [(TH2+2)W2,(TH2+3)W2)   halo row below the tile
    #   [(TH2+3)W2,(TH2+4)W2)   never written (reads masked)
    tpad_ref[:, W2:2 * W2] = T_top
    tpad_ref[:, 2 * W2:(TH2 + 2) * W2] = T_main
    tpad_ref[:, (TH2 + 2) * W2:(TH2 + 3) * W2] = T_bot

    col = lax.broadcasted_iota(jnp.int32, (1, L), 1) % W2
    left_edge = col == 0
    right_edge = col == (W2 - 1)

    conv_r = jnp.zeros((1, L), f32)
    for dy in range(3):
        for dx in range(3):
            tap = 3 * dy + dx
            start = (dy + 1) * W2 + (dx - 1)                 # static offsets
            v = tpad_ref[tap:tap + 1, start:start + L]       # (1, L) tap slice
            if dx == 0:
                v = jnp.where(left_edge, 0.0, v)             # col -1 is zero
            elif dx == 2:
                v = jnp.where(right_edge, 0.0, v)            # col W2 is zero
            conv_r = conv_r + v

    # ---- convt_I: 1 -> 1, 4x4, stride 2, pad 1 (VPU + small MXU) -----------
    i0 = t_idx * TH_LR                                        # LR row offset
    phase = [[None, None], [None, None]]
    for r in range(2):
        for s in range(2):
            acc = jnp.zeros((TH_LR, W), f32)
            for (ky, py) in _DECONV_TAPS[r]:
                for (kx, px) in _DECONV_TAPS[s]:
                    acc = acc + wT_ref[ky, kx] * lrpad_ref[
                        0, pl.ds(i0 + py, TH_LR), pl.ds(px, W)]
            phase[r][s] = acc

    s0 = s0_ref[...]
    s1 = s1_ref[...]
    q0 = (jnp.dot(phase[0][0], s0, preferred_element_type=f32) +
          jnp.dot(phase[0][1], s1, preferred_element_type=f32))   # rows 2i
    q1 = (jnp.dot(phase[1][0], s0, preferred_element_type=f32) +
          jnp.dot(phase[1][1], s1, preferred_element_type=f32))   # rows 2i+1
    convt = (jnp.dot(r0_ref[...], q0, preferred_element_type=f32) +
             jnp.dot(r1_ref[...], q1, preferred_element_type=f32))  # (TH2, W2)
    convt = convt + (bT_ref[0] + bR_ref[0])

    # ---- combine + lane-dense per-row stores -------------------------------
    for y in range(TH2):
        o_ref[0, y, :] = convt[y, :] + conv_r[0, y * W2:(y + 1) * W2]


# ----------------------------------------------------------------------------
# Wrapper: PyTorch-layout (NCHW) in / out, one fused pallas_call.
# ----------------------------------------------------------------------------
def image_reconstruction(LR, convt_F, params, *, tile_lr_rows=None,
                         feature_dtype=jnp.float32):
    """HR = convt_I(LR) + conv_R(convt_F); LR (N,1,H,W), convt_F (N,64,2H,2W)."""
    N, C1, H, W = LR.shape
    assert C1 == 1
    H2, W2 = 2 * H, 2 * W
    assert convt_F.shape == (N, CNUM, H2, W2)
    assert H % 4 == 0 and W % 8 == 0, "LR spatial dims must be multiples of (4, 8)"

    if tile_lr_rows is None:   # largest divisor of H that is a multiple of 4, <= 64
        tile_lr_rows = max(d for d in range(4, min(H, 64) + 1, 4) if H % d == 0)
    TH_LR = tile_lr_rows
    assert TH_LR % 4 == 0 and H % TH_LR == 0
    TH2 = 2 * TH_LR
    n_tiles = H // TH_LR

    # Halo blocks: smallest row count whose lane-flattened width is 128-aligned.
    hrows = 1 if (W2 % 128 == 0) else 8
    assert (hrows * W2) % 128 == 0 and TH2 % hrows == 0
    blk = TH2 // hrows                   # tile size in units of halo blocks
    n_hblocks = H2 // hrows

    # Host-side prep: tiny pad of LR + layout-preserving (free) feature reshape.
    lr_pad = jnp.pad(LR.reshape(N, H, W).astype(jnp.float32),
                     ((0, 0), (1, 1), (1, 1)))                      # (N, H+2, W+2)
    f_flat = convt_F.reshape(N, CNUM, H2 * W2).astype(feature_dtype)
    wR = params["wR"].astype(feature_dtype)                         # (9, 64)
    S0, S1, R0, R1 = _interleave_mats(W, TH_LR)

    out = pl.pallas_call(
        _image_reconstruction_kernel,
        out_shape=jax.ShapeDtypeStruct((N, H2, W2), jnp.float32),
        grid=(N, n_tiles),
        in_specs=[
            pl.BlockSpec((1, H + 2, W + 2), lambda n, t: (n, 0, 0)),      # lr_pad
            pl.BlockSpec((1, CNUM, TH2 * W2), lambda n, t: (n, 0, t)),    # f main
            pl.BlockSpec((1, CNUM, hrows * W2),
                         lambda n, t: (n, 0, jnp.maximum(t * blk - 1, 0))),    # top halo
            pl.BlockSpec((1, CNUM, hrows * W2),
                         lambda n, t: (n, 0, jnp.minimum((t + 1) * blk,
                                                         n_hblocks - 1))),     # bot halo
            pl.BlockSpec((9, CNUM), lambda n, t: (0, 0)),                 # wR
            pl.BlockSpec((W, W2), lambda n, t: (0, 0)),                   # S0
            pl.BlockSpec((W, W2), lambda n, t: (0, 0)),                   # S1
            pl.BlockSpec((TH2, TH_LR), lambda n, t: (0, 0)),              # R0
            pl.BlockSpec((TH2, TH_LR), lambda n, t: (0, 0)),              # R1
            pl.BlockSpec(memory_space=pltpu.MemorySpace.SMEM),            # wT (4,4)
            pl.BlockSpec(memory_space=pltpu.MemorySpace.SMEM),            # bT (1,)
            pl.BlockSpec(memory_space=pltpu.MemorySpace.SMEM),            # bR (1,)
        ],
        out_specs=pl.BlockSpec((1, TH2, W2), lambda n, t: (n, t, 0)),
        scratch_shapes=[pltpu.VMEM((9, (TH2 + 4) * W2), jnp.float32)],
        compiler_params=pltpu.CompilerParams(
            dimension_semantics=("parallel", "parallel"),
            vmem_limit_bytes=48 * 1024 * 1024),
    )(lr_pad, f_flat, f_flat, f_flat, wR,
      S0, S1, R0, R1, params["wT"], params["bT"], params["bR"])

    return out.reshape(N, 1, H2, W2)                  # re-attach C=1 (free)


# ----------------------------------------------------------------------------
# Parameters (nn.Conv2d(64,1,3,pad 1) + bilinear ConvTranspose2d(1,1,4,s2,p1))
# ----------------------------------------------------------------------------
def init_image_reconstruction(key):
    k1, k2, k3 = jax.random.split(key, 3)
    bound_r = 1.0 / np.sqrt(CNUM * 3 * 3)
    wR = jax.random.uniform(k1, (9, CNUM), jnp.float32, -bound_r, bound_r)  # tap-major
    bR = jax.random.uniform(k2, (1,), jnp.float32, -bound_r, bound_r)
    wT = jnp.asarray(upsample_filt(4))                                      # (4, 4)
    bound_t = 1.0 / np.sqrt(1 * 4 * 4)
    bT = jax.random.uniform(k3, (1,), jnp.float32, -bound_t, bound_t)
    return {"wR": wR, "bR": bR, "wT": wT, "bT": bT}


# ----------------------------------------------------------------------------
# Pure-JAX reference mirroring the PyTorch module (for numerical validation)
# ----------------------------------------------------------------------------
def image_reconstruction_ref(LR, convt_F, params):
    wR = params["wR"].reshape(3, 3, CNUM).transpose(2, 0, 1)[None]   # OIHW
    conv_R = lax.conv_general_dilated(
        convt_F, wR, window_strides=(1, 1), padding=((1, 1), (1, 1)),
        dimension_numbers=("NCHW", "OIHW", "NCHW")) + params["bR"][0]
    wT = params["wT"][::-1, ::-1][None, None]
    convt_I = lax.conv_general_dilated(
        LR, wT, window_strides=(1, 1), padding=((2, 2), (2, 2)),
        lhs_dilation=(2, 2),
        dimension_numbers=("NCHW", "OIHW", "NCHW")) + params["bT"][0]
    return convt_I + conv_R


# ----------------------------------------------------------------------------
if __name__ == "__main__":
    key = jax.random.PRNGKey(0)
    k_param, k_lr, k_f = jax.random.split(key, 3)

    N, H, W = 2, 8, 8                               # LR 8x8 -> HR 16x16
    params = init_image_reconstruction(k_param)
    LR = jax.random.normal(k_lr, (N, 1, H, W), jnp.float32)
    convt_F = jax.random.normal(k_f, (N, CNUM, 2 * H, 2 * W), jnp.float32)

    # tile_lr_rows=4 -> 2 HR row tiles: exercises the row-tiling + halo path.
    fwd = jax.jit(lambda a, b: image_reconstruction(a, b, params, tile_lr_rows=4))
    HR = fwd(LR, convt_F)
    jax.block_until_ready(HR)
    assert HR.shape == (N, 1, 2 * H, 2 * W), HR.shape
    assert bool(jnp.all(jnp.isfinite(HR)))

    HR_ref = image_reconstruction_ref(LR, convt_F, params)
    max_err = float(jnp.max(jnp.abs(HR - HR_ref)))
    assert max_err < 1e-3, f"f32 mismatch vs reference: max abs err = {max_err}"

    # bf16 feature path (halves feature-map DMA/VMEM on v6e/v7x); f32 accumulate.
    fwd_bf16 = jax.jit(lambda a, b: image_reconstruction(
        a, b, params, tile_lr_rows=4, feature_dtype=jnp.bfloat16))
    HR_bf16 = fwd_bf16(LR, convt_F)
    jax.block_until_ready(HR_bf16)
    max_err_bf16 = float(jnp.max(jnp.abs(HR_bf16 - HR_ref)))
    assert max_err_bf16 < 5e-2, f"bf16 mismatch vs reference: {max_err_bf16}"

    print("KERNEL_OK")
</pallas_src>

<mosaic_0001>
module attributes {stable_mosaic.version = 11 : i64} {
  func.func @_image_reconstruction_kernel(%arg0: i32, %arg1: i32, %arg2: memref<1x10x10xf32, #tpu.memory_space<vmem>>, %arg3: memref<1x64x128xf32, #tpu.memory_space<vmem>>, %arg4: memref<1x64x128xf32, #tpu.memory_space<vmem>>, %arg5: memref<1x64x128xf32, #tpu.memory_space<vmem>>, %arg6: memref<9x64xf32, #tpu.memory_space<vmem>>, %arg7: memref<8x16xf32, #tpu.memory_space<vmem>>, %arg8: memref<8x16xf32, #tpu.memory_space<vmem>>, %arg9: memref<8x4xf32, #tpu.memory_space<vmem>>, %arg10: memref<8x4xf32, #tpu.memory_space<vmem>>, %arg11: memref<4x4xf32, #tpu.memory_space<smem>>, %arg12: memref<1xf32, #tpu.memory_space<smem>>, %arg13: memref<1xf32, #tpu.memory_space<smem>>, %arg14: memref<1x8x16xf32, #tpu.memory_space<vmem>>, %arg15: memref<9x192xf32, #tpu.memory_space<vmem>>) attributes {dimension_semantics = [#tpu.dimension_semantics<parallel>, #tpu.dimension_semantics<parallel>], iteration_bounds = array<i64: 2, 2>, scalar_prefetch = 0 : i64, scratch_operands = 1 : i64, tpu.core_type = #tpu.core_type<tc>, window_params = [{transform_indices = @transform_0, window_bounds = array<i64: 1, 10, 10>}, {transform_indices = @transform_1, window_bounds = array<i64: 1, 64, 128>}, {transform_indices = @transform_2, window_bounds = array<i64: 1, 64, 128>}, {transform_indices = @transform_3, window_bounds = array<i64: 1, 64, 128>}, {pipeline_mode = #tpu.pipeline_mode<synchronous>, transform_indices = @transform_4, window_bounds = array<i64: 9, 64>}, {pipeline_mode = #tpu.pipeline_mode<synchronous>, transform_indices = @transform_5, window_bounds = array<i64: 8, 16>}, {pipeline_mode = #tpu.pipeline_mode<synchronous>, transform_indices = @transform_6, window_bounds = array<i64: 8, 16>}, {pipeline_mode = #tpu.pipeline_mode<synchronous>, transform_indices = @transform_7, window_bounds = array<i64: 8, 4>}, {pipeline_mode = #tpu.pipeline_mode<synchronous>, transform_indices = @transform_8, window_bounds = array<i64: 8, 4>}, {transform_indices = @transform_9, window_bounds = array<i64: 4, 4>}, {transform_indices = @transform_10, window_bounds = array<i64: 1>}, {transform_indices = @transform_11, window_bounds = array<i64: 1>}, {transform_indices = @transform_12, window_bounds = array<i64: 1, 8, 16>}]} {
    %c0 = arith.constant 0 : index
    %c0_0 = arith.constant 0 : index
    %0 = vector.load %arg6[%c0, %c0_0] : memref<9x64xf32, #tpu.memory_space<vmem>>, vector<9x64xf32>
    %c0_1 = arith.constant 0 : index
    %c0_2 = arith.constant 0 : index
    %c0_3 = arith.constant 0 : index
    %1 = vector.load %arg3[%c0_1, %c0_2, %c0_3] : memref<1x64x128xf32, #tpu.memory_space<vmem>>, vector<1x64x128xf32>
    %2 = vector.shape_cast %1 : vector<1x64x128xf32> to vector<64x128xf32>
    %cst = arith.constant dense<0.000000e+00> : vector<9x128xf32>
    %3 = tpu.matmul %0, %2, %cst {dimension_numbers = #tpu.dot_dimension_numbers<[1], [0], [0], [1], [0, 0, 1, 1], [], []>} : vector<9x64xf32>, vector<64x128xf32>, vector<9x128xf32> -> vector<9x128xf32>
    %c0_4 = arith.constant 0 : index
    %c0_5 = arith.constant 0 : index
    %c112 = arith.constant 112 : index
    %4 = vector.load %arg4[%c0_4, %c0_5, %c112] : memref<1x64x128xf32, #tpu.memory_space<vmem>>, vector<1x64x16xf32>
    %5 = vector.shape_cast %4 : vector<1x64x16xf32> to vector<64x16xf32>
    %c0_6 = arith.constant 0 : index
    %c0_7 = arith.constant 0 : index
    %c0_8 = arith.constant 0 : index
    %6 = vector.load %arg5[%c0_6, %c0_7, %c0_8] : memref<1x64x128xf32, #tpu.memory_space<vmem>>, vector<1x64x16xf32>
    %7 = vector.shape_cast %6 : vector<1x64x16xf32> to vector<64x16xf32>
    %cst_9 = arith.constant dense<0.000000e+00> : vector<9x16xf32>
    %8 = tpu.matmul %0, %5, %cst_9 {dimension_numbers = #tpu.dot_dimension_numbers<[1], [0], [0], [1], [0, 0, 1, 1], [], []>} : vector<9x64xf32>, vector<64x16xf32>, vector<9x16xf32> -> vector<9x16xf32>
    %cst_10 = arith.constant dense<0.000000e+00> : vector<9x16xf32>
    %9 = tpu.matmul %0, %7, %cst_10 {dimension_numbers = #tpu.dot_dimension_numbers<[1], [0], [0], [1], [0, 0, 1, 1], [], []>} : vector<9x64xf32>, vector<64x16xf32>, vector<9x16xf32> -> vector<9x16xf32>
    %c0_i32 = arith.constant 0 : i32
    %10 = arith.cmpi sgt, %arg1, %c0_i32 : i32
    %cst_11 = arith.constant 0.000000e+00 : f32
    %11 = vector.broadcast %cst_11 : f32 to vector<9x16xf32>
    %12 = arith.select %10, %8, %11 : vector<9x16xf32>
    %c1_i32 = arith.constant 1 : i32
    %13 = arith.cmpi slt, %arg1, %c1_i32 : i32
    %cst_12 = arith.constant 0.000000e+00 : f32
    %14 = vector.broadcast %cst_12 : f32 to vector<9x16xf32>
    %15 = arith.select %13, %9, %14 : vector<9x16xf32>
    %c0_13 = arith.constant 0 : index
    %c16 = arith.constant 16 : index
    %16 = vector.load %arg15[%c0_13, %c16] : memref<9x192xf32, #tpu.memory_space<vmem>>, vector<9x16xf32>
    tpu.vector_store %arg15[%c0_13, %c16], %12 {strides = array<i32>} : memref<9x192xf32, #tpu.memory_space<vmem>>, vector<9x16xf32>,
    %c0_14 = arith.constant 0 : index
    %c32 = arith.constant 32 : index
    %17 = vector.load %arg15[%c0_14, %c32] : memref<9x192xf32, #tpu.memory_space<vmem>>, vector<9x128xf32>
    tpu.vector_store %arg15[%c0_14, %c32], %3 {strides = array<i32>} : memref<9x192xf32, #tpu.memory_space<vmem>>, vector<9x128xf32>,
    %c0_15 = arith.constant 0 : index
    %c160 = arith.constant 160 : index
    %18 = vector.load %arg15[%c0_15, %c160] : memref<9x192xf32, #tpu.memory_space<vmem>>, vector<9x16xf32>
    tpu.vector_store %arg15[%c0_15, %c160], %15 {strides = array<i32>} : memref<9x192xf32, #tpu.memory_space<vmem>>, vector<9x16xf32>,
    %19 = tpu.iota {dimensions = array<i32: 1>} : vector<1x128xi32>
    %c16_i32 = arith.constant 16 : i32
    %c0_i32_16 = arith.constant 0 : i32
    %20 = arith.cmpi eq, %c16_i32, %c0_i32_16 : i32
    %c1_i32_17 = arith.constant 1 : i32
    %21 = arith.select %20, %c1_i32_17, %c16_i32 : i32
    %22 = vector.broadcast %21 : i32 to vector<1x128xi32>
    %23 = arith.remsi %19, %22 : vector<1x128xi32>
    %c0_i32_18 = arith.constant 0 : i32
    %24 = vector.broadcast %c0_i32_18 : i32 to vector<1x128xi32>
    %25 = arith.cmpi ne, %23, %24 : vector<1x128xi32>
    %c0_i32_19 = arith.constant 0 : i32
    %26 = vector.broadcast %c0_i32_19 : i32 to vector<1x128xi32>
    %27 = arith.cmpi slt, %23, %26 : vector<1x128xi32>
    %c0_i32_20 = arith.constant 0 : i32
    %28 = arith.cmpi slt, %21, %c0_i32_20 : i32
    %29 = vector.broadcast %28 : i1 to vector<1x128xi1>
    %30 = vector.broadcast %29 : vector<1x128xi1> to vector<1x128xi1>
    %31 = arith.xori %27, %30 : vector<1x128xi1>
    %32 = arith.andi %31, %25 : vector<1x128xi1>
    %33 = vector.broadcast %21 : i32 to vector<1x128xi32>
    %34 = arith.addi %23, %33 : vector<1x128xi32>
    %35 = arith.select %32, %34, %23 : vector<1x128xi1>, vector<1x128xi32>
    %c0_i32_21 = arith.constant 0 : i32
    %36 = vector.broadcast %c0_i32_21 : i32 to vector<1x128xi32>
    %37 = arith.cmpi eq, %35, %36 : vector<1x128xi32>
    %c15_i32 = arith.constant 15 : i32
    %38 = vector.broadcast %c15_i32 : i32 to vector<1x128xi32>
    %39 = arith.cmpi eq, %35, %38 : vector<1x128xi32>
    %cst_22 = arith.constant 0.000000e+00 : f32
    %40 = vector.broadcast %cst_22 : f32 to vector<1x128xf32>
    %c0_23 = arith.constant 0 : index
    %c15 = arith.constant 15 : index
    %41 = vector.load %arg15[%c0_23, %c15] : memref<9x192xf32, #tpu.memory_space<vmem>>, vector<1x128xf32>
    %cst_24 = arith.constant 0.000000e+00 : f32
    %42 = vector.broadcast %cst_24 : f32 to vector<1x128xf32>
    %43 = arith.select %37, %42, %41 : vector<1x128xi1>, vector<1x128xf32>
    %44 = arith.addf %40, %43 : vector<1x128xf32>
    %c1 = arith.constant 1 : index
    %c16_25 = arith.constant 16 : index
    %45 = vector.load %arg15[%c1, %c16_25] : memref<9x192xf32, #tpu.memory_space<vmem>>, vector<1x128xf32>
    %46 = arith.addf %44, %45 : vector<1x128xf32>
    %c2 = arith.constant 2 : index
    %c17 = arith.constant 17 : index
    %47 = vector.load %arg15[%c2, %c17] : memref<9x192xf32, #tpu.memory_space<vmem>>, vector<1x128xf32>
    %cst_26 = arith.constant 0.000000e+00 : f32
    %48 = vector.broadcast %cst_26 : f32 to vector<1x128xf32>
    %49 = arith.select %39, %48, %47 : vector<1x128xi1>, vector<1x128xf32>
    %50 = arith.addf %46, %49 : vector<1x128xf32>
    %c3 = arith.constant 3 : index
    %c31 = arith.constant 31 : index
    %51 = vector.load %arg15[%c3, %c31] : memref<9x192xf32, #tpu.memory_space<vmem>>, vector<1x128xf32>
    %cst_27 = arith.constant 0.000000e+00 : f32
    %52 = vector.broadcast %cst_27 : f32 to vector<1x128xf32>
    %53 = arith.select %37, %52, %51 : vector<1x128xi1>, vector<1x128xf32>
    %54 = arith.addf %50, %53 : vector<1x128xf32>
    %c4 = arith.constant 4 : index
    %c32_28 = arith.constant 32 : index
    %55 = vector.load %arg15[%c4, %c32_28] : memref<9x192xf32, #tpu.memory_space<vmem>>, vector<1x128xf32>
    %56 = arith.addf %54, %55 : vector<1x128xf32>
    %c5 = arith.constant 5 : index
    %c33 = arith.constant 33 : index
    %57 = vector.load %arg15[%c5, %c33] : memref<9x192xf32, #tpu.memory_space<vmem>>, vector<1x128xf32>
    %cst_29 = arith.constant 0.000000e+00 : f32
    %58 = vector.broadcast %cst_29 : f32 to vector<1x128xf32>
    %59 = arith.select %39, %58, %57 : vector<1x128xi1>, vector<1x128xf32>
    %60 = arith.addf %56, %59 : vector<1x128xf32>
    %c6 = arith.constant 6 : index
    %c47 = arith.constant 47 : index
    %61 = vector.load %arg15[%c6, %c47] : memref<9x192xf32, #tpu.memory_space<vmem>>, vector<1x128xf32>
    %cst_30 = arith.constant 0.000000e+00 : f32
    %62 = vector.broadcast %cst_30 : f32 to vector<1x128xf32>
    %63 = arith.select %37, %62, %61 : vector<1x128xi1>, vector<1x128xf32>
    %64 = arith.addf %60, %63 : vector<1x128xf32>
    %c7 = arith.constant 7 : index
    %c48 = arith.constant 48 : index
    %65 = vector.load %arg15[%c7, %c48] : memref<9x192xf32, #tpu.memory_space<vmem>>, vector<1x128xf32>
    %66 = arith.addf %64, %65 : vector<1x128xf32>
    %c8 = arith.constant 8 : index
    %c49 = arith.constant 49 : index
    %67 = vector.load %arg15[%c8, %c49] : memref<9x192xf32, #tpu.memory_space<vmem>>, vector<1x128xf32>
    %cst_31 = arith.constant 0.000000e+00 : f32
    %68 = vector.broadcast %cst_31 : f32 to vector<1x128xf32>
    %69 = arith.select %39, %68, %67 : vector<1x128xi1>, vector<1x128xf32>
    %70 = arith.addf %66, %69 : vector<1x128xf32>
    %c4_i32 = arith.constant 4 : i32
    %71 = arith.muli %arg1, %c4_i32 : i32
    %cst_32 = arith.constant 0.000000e+00 : f32
    %72 = vector.broadcast %cst_32 : f32 to vector<4x8xf32>
    %c1_33 = arith.constant 1 : index
    %c1_34 = arith.constant 1 : index
    %73 = memref.load %arg11[%c1_33, %c1_34] : memref<4x4xf32, #tpu.memory_space<smem>>
    %c1_i32_35 = arith.constant 1 : i32
    %74 = arith.addi %71, %c1_i32_35 : i32
    %c0_36 = arith.constant 0 : index
    %75 = arith.index_cast %74 : i32 to index
    %c1_37 = arith.constant 1 : index
    %76 = vector.load %arg2[%c0_36, %75, %c1_37] : memref<1x10x10xf32, #tpu.memory_space<vmem>>, vector<1x4x8xf32>
    %77 = vector.shape_cast %76 : vector<1x4x8xf32> to vector<4x8xf32>
    %78 = vector.broadcast %73 : f32 to vector<4x8xf32>
    %79 = arith.mulf %78, %77 : vector<4x8xf32>
    %80 = arith.addf %72, %79 : vector<4x8xf32>
    %c1_38 = arith.constant 1 : index
    %c3_39 = arith.constant 3 : index
    %81 = memref.load %arg11[%c1_38, %c3_39] : memref<4x4xf32, #tpu.memory_space<smem>>
    %c1_i32_40 = arith.constant 1 : i32
    %82 = arith.addi %71, %c1_i32_40 : i32
    %c0_41 = arith.constant 0 : index
    %83 = arith.index_cast %82 : i32 to index
    %c0_42 = arith.constant 0 : index
    %84 = vector.load %arg2[%c0_41, %83, %c0_42] : memref<1x10x10xf32, #tpu.memory_space<vmem>>, vector<1x4x8xf32>
    %85 = vector.shape_cast %84 : vector<1x4x8xf32> to vector<4x8xf32>
    %86 = vector.broadcast %81 : f32 to vector<4x8xf32>
    %87 = arith.mulf %86, %85 : vector<4x8xf32>
    %88 = arith.addf %80, %87 : vector<4x8xf32>
    %c3_43 = arith.constant 3 : index
    %c1_44 = arith.constant 1 : index
    %89 = memref.load %arg11[%c3_43, %c1_44] : memref<4x4xf32, #tpu.memory_space<smem>>
    %c0_i32_45 = arith.constant 0 : i32
    %90 = arith.addi %71, %c0_i32_45 : i32
    %c0_46 = arith.constant 0 : index
    %91 = arith.index_cast %90 : i32 to index
    %c1_47 = arith.constant 1 : index
    %92 = vector.load %arg2[%c0_46, %91, %c1_47] : memref<1x10x10xf32, #tpu.memory_space<vmem>>, vector<1x4x8xf32>
    %93 = vector.shape_cast %92 : vector<1x4x8xf32> to vector<4x8xf32>
    %94 = vector.broadcast %89 : f32 to vector<4x8xf32>
    %95 = arith.mulf %94, %93 : vector<4x8xf32>
    %96 = arith.addf %88, %95 : vector<4x8xf32>
    %c3_48 = arith.constant 3 : index
    %c3_49 = arith.constant 3 : index
    %97 = memref.load %arg11[%c3_48, %c3_49] : memref<4x4xf32, #tpu.memory_space<smem>>
    %c0_i32_50 = arith.constant 0 : i32
    %98 = arith.addi %71, %c0_i32_50 : i32
    %c0_51 = arith.constant 0 : index
    %99 = arith.index_cast %98 : i32 to index
    %c0_52 = arith.constant 0 : index
    %100 = vector.load %arg2[%c0_51, %99, %c0_52] : memref<1x10x10xf32, #tpu.memory_space<vmem>>, vector<1x4x8xf32>
    %101 = vector.shape_cast %100 : vector<1x4x8xf32> to vector<4x8xf32>
    %102 = vector.broadcast %97 : f32 to vector<4x8xf32>
    %103 = arith.mulf %102, %101 : vector<4x8xf32>
    %104 = arith.addf %96, %103 : vector<4x8xf32>
    %cst_53 = arith.constant 0.000000e+00 : f32
    %105 = vector.broadcast %cst_53 : f32 to vector<4x8xf32>
    %c1_54 = arith.constant 1 : index
    %c0_55 = arith.constant 0 : index
    %106 = memref.load %arg11[%c1_54, %c0_55] : memref<4x4xf32, #tpu.memory_space<smem>>
    %c1_i32_56 = arith.constant 1 : i32
    %107 = arith.addi %71, %c1_i32_56 : i32
    %c0_57 = arith.constant 0 : index
    %108 = arith.index_cast %107 : i32 to index
    %c2_58 = arith.constant 2 : index
    %109 = vector.load %arg2[%c0_57, %108, %c2_58] : memref<1x10x10xf32, #tpu.memory_space<vmem>>, vector<1x4x8xf32>
    %110 = vector.shape_cast %109 : vector<1x4x8xf32> to vector<4x8xf32>
    %111 = vector.broadcast %106 : f32 to vector<4x8xf32>
    %112 = arith.mulf %111, %110 : vector<4x8xf32>
    %113 = arith.addf %105, %112 : vector<4x8xf32>
    %c1_59 = arith.constant 1 : index
    %c2_60 = arith.constant 2 : index
    %114 = memref.load %arg11[%c1_59, %c2_60] : memref<4x4xf32, #tpu.memory_space<smem>>
    %c1_i32_61 = arith.constant 1 : i32
    %115 = arith.addi %71, %c1_i32_61 : i32
    %c0_62 = arith.constant 0 : index
    %116 = arith.index_cast %115 : i32 to index
    %c1_63 = arith.constant 1 : index
    %117 = vector.load %arg2[%c0_62, %116, %c1_63] : memref<1x10x10xf32, #tpu.memory_space<vmem>>, vector<1x4x8xf32>
    %118 = vector.shape_cast %117 : vector<1x4x8xf32> to vector<4x8xf32>
    %119 = vector.broadcast %114 : f32 to vector<4x8xf32>
    %120 = arith.mulf %119, %118 : vector<4x8xf32>
    %121 = arith.addf %113, %120 : vector<4x8xf32>
    %c3_64 = arith.constant 3 : index
    %c0_65 = arith.constant 0 : index
    %122 = memref.load %arg11[%c3_64, %c0_65] : memref<4x4xf32, #tpu.memory_space<smem>>
    %c0_i32_66 = arith.constant 0 : i32
    %123 = arith.addi %71, %c0_i32_66 : i32
    %c0_67 = arith.constant 0 : index
    %124 = arith.index_cast %123 : i32 to index
    %c2_68 = arith.constant 2 : index
    %125 = vector.load %arg2[%c0_67, %124, %c2_68] : memref<1x10x10xf32, #tpu.memory_space<vmem>>, vector<1x4x8xf32>
    %126 = vector.shape_cast %125 : vector<1x4x8xf32> to vector<4x8xf32>
    %127 = vector.broadcast %122 : f32 to vector<4x8xf32>
    %128 = arith.mulf %127, %126 : vector<4x8xf32>
    %129 = arith.addf %121, %128 : vector<4x8xf32>
    %c3_69 = arith.constant 3 : index
    %c2_70 = arith.constant 2 : index
    %130 = memref.load %arg11[%c3_69, %c2_70] : memref<4x4xf32, #tpu.memory_space<smem>>
    %c0_i32_71 = arith.constant 0 : i32
    %131 = arith.addi %71, %c0_i32_71 : i32
    %c0_72 = arith.constant 0 : index
    %132 = arith.index_cast %131 : i32 to index
    %c1_73 = arith.constant 1 : index
    %133 = vector.load %arg2[%c0_72, %132, %c1_73] : memref<1x10x10xf32, #tpu.memory_space<vmem>>, vector<1x4x8xf32>
    %134 = vector.shape_cast %133 : vector<1x4x8xf32> to vector<4x8xf32>
    %135 = vector.broadcast %130 : f32 to vector<4x8xf32>
    %136 = arith.mulf %135, %134 : vector<4x8xf32>
    %137 = arith.addf %129, %136 : vector<4x8xf32>
    %cst_74 = arith.constant 0.000000e+00 : f32
    %138 = vector.broadcast %cst_74 : f32 to vector<4x8xf32>
    %c0_75 = arith.constant 0 : index
    %c1_76 = arith.constant 1 : index
    %139 = memref.load %arg11[%c0_75, %c1_76] : memref<4x4xf32, #tpu.memory_space<smem>>
    %c2_i32 = arith.constant 2 : i32
    %140 = arith.addi %71, %c2_i32 : i32
    %c0_77 = arith.constant 0 : index
    %141 = arith.index_cast %140 : i32 to index
    %c1_78 = arith.constant 1 : index
    %142 = vector.load %arg2[%c0_77, %141, %c1_78] : memref<1x10x10xf32, #tpu.memory_space<vmem>>, vector<1x4x8xf32>
    %143 = vector.shape_cast %142 : vector<1x4x8xf32> to vector<4x8xf32>
    %144 = vector.broadcast %139 : f32 to vector<4x8xf32>
    %145 = arith.mulf %144, %143 : vector<4x8xf32>
    %146 = arith.addf %138, %145 : vector<4x8xf32>
    %c0_79 = arith.constant 0 : index
    %c3_80 = arith.constant 3 : index
    %147 = memref.load %arg11[%c0_79, %c3_80] : memref<4x4xf32, #tpu.memory_space<smem>>
    %c2_i32_81 = arith.constant 2 : i32
    %148 = arith.addi %71, %c2_i32_81 : i32
    %c0_82 = arith.constant 0 : index
    %149 = arith.index_cast %148 : i32 to index
    %c0_83 = arith.constant 0 : index
    %150 = vector.load %arg2[%c0_82, %149, %c0_83] : memref<1x10x10xf32, #tpu.memory_space<vmem>>, vector<1x4x8xf32>
    %151 = vector.shape_cast %150 : vector<1x4x8xf32> to vector<4x8xf32>
    %152 = vector.broadcast %147 : f32 to vector<4x8xf32>
    %153 = arith.mulf %152, %151 : vector<4x8xf32>
    %154 = arith.addf %146, %153 : vector<4x8xf32>
    %c2_84 = arith.constant 2 : index
    %c1_85 = arith.constant 1 : index
    %155 = memref.load %arg11[%c2_84, %c1_85] : memref<4x4xf32, #tpu.memory_space<smem>>
    %c1_i32_86 = arith.constant 1 : i32
    %156 = arith.addi %71, %c1_i32_86 : i32
    %c0_87 = arith.constant 0 : index
    %157 = arith.index_cast %156 : i32 to index
    %c1_88 = arith.constant 1 : index
    %158 = vector.load %arg2[%c0_87, %157, %c1_88] : memref<1x10x10xf32, #tpu.memory_space<vmem>>, vector<1x4x8xf32>
    %159 = vector.shape_cast %158 : vector<1x4x8xf32> to vector<4x8xf32>
    %160 = vector.broadcast %155 : f32 to vector<4x8xf32>
    %161 = arith.mulf %160, %159 : vector<4x8xf32>
    %162 = arith.addf %154, %161 : vector<4x8xf32>
    %c2_89 = arith.constant 2 : index
    %c3_90 = arith.constant 3 : index
    %163 = memref.load %arg11[%c2_89, %c3_90] : memref<4x4xf32, #tpu.memory_space<smem>>
    %c1_i32_91 = arith.constant 1 : i32
    %164 = arith.addi %71, %c1_i32_91 : i32
    %c0_92 = arith.constant 0 : index
    %165 = arith.index_cast %164 : i32 to index
    %c0_93 = arith.constant 0 : index
    %166 = vector.load %arg2[%c0_92, %165, %c0_93] : memref<1x10x10xf32, #tpu.memory_space<vmem>>, vector<1x4x8xf32>
    %167 = vector.shape_cast %166 : vector<1x4x8xf32> to vector<4x8xf32>
    %168 = vector.broadcast %163 : f32 to vector<4x8xf32>
    %169 = arith.mulf %168, %167 : vector<4x8xf32>
    %170 = arith.addf %162, %169 : vector<4x8xf32>
    %cst_94 = arith.constant 0.000000e+00 : f32
    %171 = vector.broadcast %cst_94 : f32 to vector<4x8xf32>
    %c0_95 = arith.constant 0 : index
    %c0_96 = arith.constant 0 : index
    %172 = memref.load %arg11[%c0_95, %c0_96] : memref<4x4xf32, #tpu.memory_space<smem>>
    %c2_i32_97 = arith.constant 2 : i32
    %173 = arith.addi %71, %c2_i32_97 : i32
    %c0_98 = arith.constant 0 : index
    %174 = arith.index_cast %173 : i32 to index
    %c2_99 = arith.constant 2 : index
    %175 = vector.load %arg2[%c0_98, %174, %c2_99] : memref<1x10x10xf32, #tpu.memory_space<vmem>>, vector<1x4x8xf32>
    %176 = vector.shape_cast %175 : vector<1x4x8xf32> to vector<4x8xf32>
    %177 = vector.broadcast %172 : f32 to vector<4x8xf32>
    %178 = arith.mulf %177, %176 : vector<4x8xf32>
    %179 = arith.addf %171, %178 : vector<4x8xf32>
    %c0_100 = arith.constant 0 : index
    %c2_101 = arith.constant 2 : index
    %180 = memref.load %arg11[%c0_100, %c2_101] : memref<4x4xf32, #tpu.memory_space<smem>>
    %c2_i32_102 = arith.constant 2 : i32
    %181 = arith.addi %71, %c2_i32_102 : i32
    %c0_103 = arith.constant 0 : index
    %182 = arith.index_cast %181 : i32 to index
    %c1_104 = arith.constant 1 : index
    %183 = vector.load %arg2[%c0_103, %182, %c1_104] : memref<1x10x10xf32, #tpu.memory_space<vmem>>, vector<1x4x8xf32>
    %184 = vector.shape_cast %183 : vector<1x4x8xf32> to vector<4x8xf32>
    %185 = vector.broadcast %180 : f32 to vector<4x8xf32>
    %186 = arith.mulf %185, %184 : vector<4x8xf32>
    %187 = arith.addf %179, %186 : vector<4x8xf32>
    %c2_105 = arith.constant 2 : index
    %c0_106 = arith.constant 0 : index
    %188 = memref.load %arg11[%c2_105, %c0_106] : memref<4x4xf32, #tpu.memory_space<smem>>
    %c1_i32_107 = arith.constant 1 : i32
    %189 = arith.addi %71, %c1_i32_107 : i32
    %c0_108 = arith.constant 0 : index
    %190 = arith.index_cast %189 : i32 to index
    %c2_109 = arith.constant 2 : index
    %191 = vector.load %arg2[%c0_108, %190, %c2_109] : memref<1x10x10xf32, #tpu.memory_space<vmem>>, vector<1x4x8xf32>
    %192 = vector.shape_cast %191 : vector<1x4x8xf32> to vector<4x8xf32>
    %193 = vector.broadcast %188 : f32 to vector<4x8xf32>
    %194 = arith.mulf %193, %192 : vector<4x8xf32>
    %195 = arith.addf %187, %194 : vector<4x8xf32>
    %c2_110 = arith.constant 2 : index
    %c2_111 = arith.constant 2 : index
    %196 = memref.load %arg11[%c2_110, %c2_111] : memref<4x4xf32, #tpu.memory_space<smem>>
    %c1_i32_112 = arith.constant 1 : i32
    %197 = arith.addi %71, %c1_i32_112 : i32
    %c0_113 = arith.constant 0 : index
    %198 = arith.index_cast %197 : i32 to index
    %c1_114 = arith.constant 1 : index
    %199 = vector.load %arg2[%c0_113, %198, %c1_114] : memref<1x10x10xf32, #tpu.memory_space<vmem>>, vector<1x4x8xf32>
    %200 = vector.shape_cast %199 : vector<1x4x8xf32> to vector<4x8xf32>
    %201 = vector.broadcast %196 : f32 to vector<4x8xf32>
    %202 = arith.mulf %201, %200 : vector<4x8xf32>
    %203 = arith.addf %195, %202 : vector<4x8xf32>
    %c0_115 = arith.constant 0 : index
    %c0_116 = arith.constant 0 : index
    %204 = vector.load %arg7[%c0_115, %c0_116] : memref<8x16xf32, #tpu.memory_space<vmem>>, vector<8x16xf32>
    %c0_117 = arith.constant 0 : index
    %c0_118 = arith.constant 0 : index
    %205 = vector.load %arg8[%c0_117, %c0_118] : memref<8x16xf32, #tpu.memory_space<vmem>>, vector<8x16xf32>
    %cst_119 = arith.constant dense<0.000000e+00> : vector<4x16xf32>
    %206 = tpu.matmul %104, %204, %cst_119 {dimension_numbers = #tpu.dot_dimension_numbers<[1], [0], [0], [1], [0, 0, 1, 1], [], []>} : vector<4x8xf32>, vector<8x16xf32>, vector<4x16xf32> -> vector<4x16xf32>
    %cst_120 = arith.constant dense<0.000000e+00> : vector<4x16xf32>
    %207 = tpu.matmul %137, %205, %cst_120 {dimension_numbers = #tpu.dot_dimension_numbers<[1], [0], [0], [1], [0, 0, 1, 1], [], []>} : vector<4x8xf32>, vector<8x16xf32>, vector<4x16xf32> -> vector<4x16xf32>
    %208 = arith.addf %206, %207 : vector<4x16xf32>
    %cst_121 = arith.constant dense<0.000000e+00> : vector<4x16xf32>
    %209 = tpu.matmul %170, %204, %cst_121 {dimension_numbers = #tpu.dot_dimension_numbers<[1], [0], [0], [1], [0, 0, 1, 1], [], []>} : vector<4x8xf32>, vector<8x16xf32>, vector<4x16xf32> -> vector<4x16xf32>
    %cst_122 = arith.constant dense<0.000000e+00> : vector<4x16xf32>
    %210 = tpu.matmul %203, %205, %cst_122 {dimension_numbers = #tpu.dot_dimension_numbers<[1], [0], [0], [1], [0, 0, 1, 1], [], []>} : vector<4x8xf32>, vector<8x16xf32>, vector<4x16xf32> -> vector<4x16xf32>
    %211 = arith.addf %209, %210 : vector<4x16xf32>
    %c0_123 = arith.constant 0 : index
    %c0_124 = arith.constant 0 : index
    %212 = vector.load %arg9[%c0_123, %c0_124] : memref<8x4xf32, #tpu.memory_space<vmem>>, vector<8x4xf32>
    %cst_125 = arith.constant dense<0.000000e+00> : vector<8x16xf32>
    %213 = tpu.matmul %212, %208, %cst_125 {dimension_numbers = #tpu.dot_dimension_numbers<[1], [0], [0], [1], [0, 0, 1, 1], [], []>} : vector<8x4xf32>, vector<4x16xf32>, vector<8x16xf32> -> vector<8x16xf32>
    %c0_126 = arith.constant 0 : index
    %c0_127 = arith.constant 0 : index
    %214 = vector.load %arg10[%c0_126, %c0_127] : memref<8x4xf32, #tpu.memory_space<vmem>>, vector<8x4xf32>
    %cst_128 = arith.constant dense<0.000000e+00> : vector<8x16xf32>
    %215 = tpu.matmul %214, %211, %cst_128 {dimension_numbers = #tpu.dot_dimension_numbers<[1], [0], [0], [1], [0, 0, 1, 1], [], []>} : vector<8x4xf32>, vector<4x16xf32>, vector<8x16xf32> -> vector<8x16xf32>
    %216 = arith.addf %213, %215 : vector<8x16xf32>
    %c0_129 = arith.constant 0 : index
    %217 = memref.load %arg12[%c0_129] : memref<1xf32, #tpu.memory_space<smem>>
    %c0_130 = arith.constant 0 : index
    %218 = memref.load %arg13[%c0_130] : memref<1xf32, #tpu.memory_space<smem>>
    %219 = arith.addf %217, %218 : f32
    %220 = vector.broadcast %219 : f32 to vector<8x16xf32>
    %221 = arith.addf %216, %220 : vector<8x16xf32>
    %222 = vector.extract_strided_slice %221 {offsets = [0, 0], sizes = [1, 16], strides = [1, 1]} : vector<8x16xf32> to vector<1x16xf32>
    %223 = vector.shape_cast %222 : vector<1x16xf32> to vector<16xf32>
    %224 = vector.extract_strided_slice %70 {offsets = [0, 0], sizes = [1, 16], strides = [1, 1]} : vector<1x128xf32> to vector<1x16xf32>
    %225 = vector.shape_cast %224 : vector<1x16xf32> to vector<16xf32>
    %226 = arith.addf %223, %225 : vector<16xf32>
    %c0_131 = arith.constant 0 : index
    %c0_132 = arith.constant 0 : index
    %c0_133 = arith.constant 0 : index
    %227 = vector.load %arg14[%c0_131, %c0_132, %c0_133] : memref<1x8x16xf32, #tpu.memory_space<vmem>>, vector<1x1x16xf32>
    %228 = vector.shape_cast %227 : vector<1x1x16xf32> to vector<16xf32>
    %229 = vector.shape_cast %226 : vector<16xf32> to vector<1x1x16xf32>
    tpu.vector_store %arg14[%c0_131, %c0_132, %c0_133], %229 {strides = array<i32>} : memref<1x8x16xf32, #tpu.memory_space<vmem>>, vector<1x1x16xf32>,
    %230 = vector.extract_strided_slice %221 {offsets = [1, 0], sizes = [1, 16], strides = [1, 1]} : vector<8x16xf32> to vector<1x16xf32>
    %231 = vector.shape_cast %230 : vector<1x16xf32> to vector<16xf32>
    %232 = vector.extract_strided_slice %70 {offsets = [0, 16], sizes = [1, 16], strides = [1, 1]} : vector<1x128xf32> to vector<1x16xf32>
    %233 = vector.shape_cast %232 : vector<1x16xf32> to vector<16xf32>
    %234 = arith.addf %231, %233 : vector<16xf32>
    %c0_134 = arith.constant 0 : index
    %c1_135 = arith.constant 1 : index
    %c0_136 = arith.constant 0 : index
    %235 = vector.load %arg14[%c0_134, %c1_135, %c0_136] : memref<1x8x16xf32, #tpu.memory_space<vmem>>, vector<1x1x16xf32>
    %236 = vector.shape_cast %235 : vector<1x1x16xf32> to vector<16xf32>
    %237 = vector.shape_cast %234 : vector<16xf32> to vector<1x1x16xf32>
    tpu.vector_store %arg14[%c0_134, %c1_135, %c0_136], %237 {strides = array<i32>} : memref<1x8x16xf32, #tpu.memory_space<vmem>>, vector<1x1x16xf32>,
    %238 = vector.extract_strided_slice %221 {offsets = [2, 0], sizes = [1, 16], strides = [1, 1]} : vector<8x16xf32> to vector<1x16xf32>
    %239 = vector.shape_cast %238 : vector<1x16xf32> to vector<16xf32>
    %240 = vector.extract_strided_slice %70 {offsets = [0, 32], sizes = [1, 16], strides = [1, 1]} : vector<1x128xf32> to vector<1x16xf32>
    %241 = vector.shape_cast %240 : vector<1x16xf32> to vector<16xf32>
    %242 = arith.addf %239, %241 : vector<16xf32>
    %c0_137 = arith.constant 0 : index
    %c2_138 = arith.constant 2 : index
    %c0_139 = arith.constant 0 : index
    %243 = vector.load %arg14[%c0_137, %c2_138, %c0_139] : memref<1x8x16xf32, #tpu.memory_space<vmem>>, vector<1x1x16xf32>
    %244 = vector.shape_cast %243 : vector<1x1x16xf32> to vector<16xf32>
    %245 = vector.shape_cast %242 : vector<16xf32> to vector<1x1x16xf32>
    tpu.vector_store %arg14[%c0_137, %c2_138, %c0_139], %245 {strides = array<i32>} : memref<1x8x16xf32, #tpu.memory_space<vmem>>, vector<1x1x16xf32>,
    %246 = vector.extract_strided_slice %221 {offsets = [3, 0], sizes = [1, 16], strides = [1, 1]} : vector<8x16xf32> to vector<1x16xf32>
    %247 = vector.shape_cast %246 : vector<1x16xf32> to vector<16xf32>
    %248 = vector.extract_strided_slice %70 {offsets = [0, 48], sizes = [1, 16], strides = [1, 1]} : vector<1x128xf32> to vector<1x16xf32>
    %249 = vector.shape_cast %248 : vector<1x16xf32> to vector<16xf32>
    %250 = arith.addf %247, %249 : vector<16xf32>
    %c0_140 = arith.constant 0 : index
    %c3_141 = arith.constant 3 : index
    %c0_142 = arith.constant 0 : index
    %251 = vector.load %arg14[%c0_140, %c3_141, %c0_142] : memref<1x8x16xf32, #tpu.memory_space<vmem>>, vector<1x1x16xf32>
    %252 = vector.shape_cast %251 : vector<1x1x16xf32> to vector<16xf32>
    %253 = vector.shape_cast %250 : vector<16xf32> to vector<1x1x16xf32>
    tpu.vector_store %arg14[%c0_140, %c3_141, %c0_142], %253 {strides = array<i32>} : memref<1x8x16xf32, #tpu.memory_space<vmem>>, vector<1x1x16xf32>,
    %254 = vector.extract_strided_slice %221 {offsets = [4, 0], sizes = [1, 16], strides = [1, 1]} : vector<8x16xf32> to vector<1x16xf32>
    %255 = vector.shape_cast %254 : vector<1x16xf32> to vector<16xf32>
    %256 = vector.extract_strided_slice %70 {offsets = [0, 64], sizes = [1, 16], strides = [1, 1]} : vector<1x128xf32> to vector<1x16xf32>
    %257 = vector.shape_cast %256 : vector<1x16xf32> to vector<16xf32>
    %258 = arith.addf %255, %257 : vector<16xf32>
    %c0_143 = arith.constant 0 : index
    %c4_144 = arith.constant 4 : index
    %c0_145 = arith.constant 0 : index
    %259 = vector.load %arg14[%c0_143, %c4_144, %c0_145] : memref<1x8x16xf32, #tpu.memory_space<vmem>>, vector<1x1x16xf32>
    %260 = vector.shape_cast %259 : vector<1x1x16xf32> to vector<16xf32>
    %261 = vector.shape_cast %258 : vector<16xf32> to vector<1x1x16xf32>
    tpu.vector_store %arg14[%c0_143, %c4_144, %c0_145], %261 {strides = array<i32>} : memref<1x8x16xf32, #tpu.memory_space<vmem>>, vector<1x1x16xf32>,
    %262 = vector.extract_strided_slice %221 {offsets = [5, 0], sizes = [1, 16], strides = [1, 1]} : vector<8x16xf32> to vector<1x16xf32>
    %263 = vector.shape_cast %262 : vector<1x16xf32> to vector<16xf32>
    %264 = vector.extract_strided_slice %70 {offsets = [0, 80], sizes = [1, 16], strides = [1, 1]} : vector<1x128xf32> to vector<1x16xf32>
    %265 = vector.shape_cast %264 : vector<1x16xf32> to vector<16xf32>
    %266 = arith.addf %263, %265 : vector<16xf32>
    %c0_146 = arith.constant 0 : index
    %c5_147 = arith.constant 5 : index
    %c0_148 = arith.constant 0 : index
    %267 = vector.load %arg14[%c0_146, %c5_147, %c0_148] : memref<1x8x16xf32, #tpu.memory_space<vmem>>, vector<1x1x16xf32>
    %268 = vector.shape_cast %267 : vector<1x1x16xf32> to vector<16xf32>
    %269 = vector.shape_cast %266 : vector<16xf32> to vector<1x1x16xf32>
    tpu.vector_store %arg14[%c0_146, %c5_147, %c0_148], %269 {strides = array<i32>} : memref<1x8x16xf32, #tpu.memory_space<vmem>>, vector<1x1x16xf32>,
    %270 = vector.extract_strided_slice %221 {offsets = [6, 0], sizes = [1, 16], strides = [1, 1]} : vector<8x16xf32> to vector<1x16xf32>
    %271 = vector.shape_cast %270 : vector<1x16xf32> to vector<16xf32>
    %272 = vector.extract_strided_slice %70 {offsets = [0, 96], sizes = [1, 16], strides = [1, 1]} : vector<1x128xf32> to vector<1x16xf32>
    %273 = vector.shape_cast %272 : vector<1x16xf32> to vector<16xf32>
    %274 = arith.addf %271, %273 : vector<16xf32>
    %c0_149 = arith.constant 0 : index
    %c6_150 = arith.constant 6 : index
    %c0_151 = arith.constant 0 : index
    %275 = vector.load %arg14[%c0_149, %c6_150, %c0_151] : memref<1x8x16xf32, #tpu.memory_space<vmem>>, vector<1x1x16xf32>
    %276 = vector.shape_cast %275 : vector<1x1x16xf32> to vector<16xf32>
    %277 = vector.shape_cast %274 : vector<16xf32> to vector<1x1x16xf32>
    tpu.vector_store %arg14[%c0_149, %c6_150, %c0_151], %277 {strides = array<i32>} : memref<1x8x16xf32, #tpu.memory_space<vmem>>, vector<1x1x16xf32>,
    %278 = vector.extract_strided_slice %221 {offsets = [7, 0], sizes = [1, 16], strides = [1, 1]} : vector<8x16xf32> to vector<1x16xf32>
    %279 = vector.shape_cast %278 : vector<1x16xf32> to vector<16xf32>
    %280 = vector.extract_strided_slice %70 {offsets = [0, 112], sizes = [1, 16], strides = [1, 1]} : vector<1x128xf32> to vector<1x16xf32>
    %281 = vector.shape_cast %280 : vector<1x16xf32> to vector<16xf32>
    %282 = arith.addf %279, %281 : vector<16xf32>
    %c0_152 = arith.constant 0 : index
    %c7_153 = arith.constant 7 : index
    %c0_154 = arith.constant 0 : index
    %283 = vector.load %arg14[%c0_152, %c7_153, %c0_154] : memref<1x8x16xf32, #tpu.memory_space<vmem>>, vector<1x1x16xf32>
    %284 = vector.shape_cast %283 : vector<1x1x16xf32> to vector<16xf32>
    %285 = vector.shape_cast %282 : vector<16xf32> to vector<1x1x16xf32>
    tpu.vector_store %arg14[%c0_152, %c7_153, %c0_154], %285 {strides = array<i32>} : memref<1x8x16xf32, #tpu.memory_space<vmem>>, vector<1x1x16xf32>,
    return
  }
  func.func @transform_0(%arg0: i32, %arg1: i32) -> (i32, i32, i32) {
    %c0_i32 = arith.constant 0 : i32
    %c0_i32_0 = arith.constant 0 : i32
    %c0_i32_1 = arith.constant 0 : i32
    return %arg0, %c0_i32, %c0_i32_0 : i32, i32, i32
  }
  func.func @transform_1(%arg0: i32, %arg1: i32) -> (i32, i32, i32) {
    %c0_i32 = arith.constant 0 : i32
    %c0_i32_0 = arith.constant 0 : i32
    return %arg0, %c0_i32, %arg1 : i32, i32, i32
  }
  func.func @transform_2(%arg0: i32, %arg1: i32) -> (i32, i32, i32) {
    %c1_i32 = arith.constant 1 : i32
    %0 = arith.muli %arg1, %c1_i32 : i32
    %c1_i32_0 = arith.constant 1 : i32
    %1 = arith.subi %0, %c1_i32_0 : i32
    %c0_i32 = arith.constant 0 : i32
    %2 = arith.maxsi %1, %c0_i32 : i32
    %c0_i32_1 = arith.constant 0 : i32
    %c0_i32_2 = arith.constant 0 : i32
    return %arg0, %c0_i32_1, %2 : i32, i32, i32
  }
  func.func @transform_3(%arg0: i32, %arg1: i32) -> (i32, i32, i32) {
    %c1_i32 = arith.constant 1 : i32
    %0 = arith.addi %arg1, %c1_i32 : i32
    %c1_i32_0 = arith.constant 1 : i32
    %1 = arith.muli %0, %c1_i32_0 : i32
    %c1_i32_1 = arith.constant 1 : i32
    %2 = arith.minsi %1, %c1_i32_1 : i32
    %c0_i32 = arith.constant 0 : i32
    %c0_i32_2 = arith.constant 0 : i32
    return %arg0, %c0_i32, %2 : i32, i32, i32
  }
  func.func @transform_4(%arg0: i32, %arg1: i32) -> (i32, i32) {
    %c0_i32 = arith.constant 0 : i32
    %c0_i32_0 = arith.constant 0 : i32
    %c0_i32_1 = arith.constant 0 : i32
    return %c0_i32, %c0_i32_0 : i32, i32
  }
  func.func @transform_5(%arg0: i32, %arg1: i32) -> (i32, i32) {
    %c0_i32 = arith.constant 0 : i32
    %c0_i32_0 = arith.constant 0 : i32
    %c0_i32_1 = arith.constant 0 : i32
    return %c0_i32, %c0_i32_0 : i32, i32
  }
  func.func @transform_6(%arg0: i32, %arg1: i32) -> (i32, i32) {
    %c0_i32 = arith.constant 0 : i32
    %c0_i32_0 = arith.constant 0 : i32
    %c0_i32_1 = arith.constant 0 : i32
    return %c0_i32, %c0_i32_0 : i32, i32
  }
  func.func @transform_7(%arg0: i32, %arg1: i32) -> (i32, i32) {
    %c0_i32 = arith.constant 0 : i32
    %c0_i32_0 = arith.constant 0 : i32
    %c0_i32_1 = arith.constant 0 : i32
    return %c0_i32, %c0_i32_0 : i32, i32
  }
  func.func @transform_8(%arg0: i32, %arg1: i32) -> (i32, i32) {
    %c0_i32 = arith.constant 0 : i32
    %c0_i32_0 = arith.constant 0 : i32
    %c0_i32_1 = arith.constant 0 : i32
    return %c0_i32, %c0_i32_0 : i32, i32
  }
  func.func @transform_9(%arg0: i32, %arg1: i32) -> (i32, i32) {
    %c0_i32 = arith.constant 0 : i32
    %c0_i32_0 = arith.constant 0 : i32
    %c0_i32_1 = arith.constant 0 : i32
    return %c0_i32, %c0_i32_0 : i32, i32
  }
  func.func @transform_10(%arg0: i32, %arg1: i32) -> i32 {
    %c0_i32 = arith.constant 0 : i32
    %c0_i32_0 = arith.constant 0 : i32
    return %c0_i32 : i32
  }
  func.func @transform_11(%arg0: i32, %arg1: i32) -> i32 {
    %c0_i32 = arith.constant 0 : i32
    %c0_i32_0 = arith.constant 0 : i32
    return %c0_i32 : i32
  }
  func.func @transform_12(%arg0: i32, %arg1: i32) -> (i32, i32, i32) {
    %c0_i32 = arith.constant 0 : i32
    %c0_i32_0 = arith.constant 0 : i32
    return %arg0, %arg1, %c0_i32 : i32, i32, i32
  }
}

</mosaic_0001>

<llo_original>
// kernel: _lambda_.1
$region0: #{_lambda_.1}
  #allocation0 [shape = 'u32[]', space=smem, size = 0x4, offset = 0x4, fixed_abs, tag = 'smem constant byte address 0x4 - core index']
  #allocation1 [shape = 'u32[144,128]{1,0:T(1,128)}', space=vmem, size = 0x12000, scoped, tag = 'internal scratch']
  #allocation2 [shape = 'f32[9,192]{1,0:T(8,128)}', space=vmem, size = 0x4000, scoped, tag = 'scratch operand']
  #allocation3 [shape = 'f32[1]{0:T(128)S(6)}', space=smem, size = 0x200, scoped, tag = 'scoped memory for _lambda_.1']
  #allocation4 [shape = 'f32[1]{0:T(128)S(6)}', space=smem, size = 0x200, scoped, tag = 'scoped memory for _lambda_.1']
  %s0 = inlined_call_operand.vmem [shape: f32[2,10,10], index: 0, kind: input, shape index: {}]
  %s1 = inlined_call_operand.vmem [shape: f32[2,64,256], index: 1, kind: input, shape index: {}, may-alias: {1,2,3}]
  %s2 = inlined_call_operand.vmem [shape: f32[2,64,256], index: 2, kind: input, shape index: {}, may-alias: {1,2,3}]
  %s3 = inlined_call_operand.vmem [shape: f32[2,64,256], index: 3, kind: input, shape index: {}, may-alias: {1,2,3}]
  %s4 = inlined_call_operand.vmem [shape: f32[9,64], index: 4, kind: input, shape index: {}]
  %s5 = inlined_call_operand.vmem [shape: f32[8,16], index: 5, kind: input, shape index: {}]
  %s6 = inlined_call_operand.vmem [shape: f32[8,16], index: 6, kind: input, shape index: {}]
  %s7 = inlined_call_operand.vmem [shape: f32[8,4], index: 7, kind: input, shape index: {}]
  %s8 = inlined_call_operand.vmem [shape: f32[8,4], index: 8, kind: input, shape index: {}]
  %s9 = inlined_call_operand.vmem [shape: f32[4,4], index: 9, kind: input, shape index: {}]
  %s10 = inlined_call_operand.<no memory space> [shape: f32[1], index: 10, kind: input, shape index: {}]
  %s11 = inlined_call_operand.<no memory space> [shape: f32[1], index: 11, kind: input, shape index: {}]
  %s12 = inlined_call_operand.hbm [shape: f32[2,16,16], index: 12, kind: output, shape index: {}]
  %s13 = sld [smem:[#allocation0]]
  $region199: #{_lambda_.1} parent=0
    _
  %s15 = ssub.s32 1, %s13
  %s16 = scalar_select 0, %s15, %s13
  %17 = sst [smem:[#allocation3]] %s10
  %18 = sst [smem:[#allocation4]] %s11
  $region1: #{_lambda_.1} parent=0
    #allocation5 [shape = 'u8[65536]{0}', space=vmem, size = 0x10000, scoped, tag = 'input window, operand 1']
    #allocation6 [shape = 'u8[65536]{0}', space=vmem, size = 0x10000, scoped, tag = 'input window, operand 2']
    #allocation7 [shape = 'u8[65536]{0}', space=vmem, size = 0x10000, scoped, tag = 'input window, operand 3']
    #allocation8 [shape = 'u8[2048]{0}', space=smem, size = 0x800, scoped, tag = 'input window, operand 9, single buffered']
    #allocation9 [shape = 's32[2]{0}', space=sflag, size = 0x8, scoped, tag = 'scoped memory for _lambda_.1']
    #allocation10 [shape = 's32[2]{0}', space=sflag, size = 0x8, scoped, tag = 'scoped memory for _lambda_.1']
    #allocation11 [shape = 'u8[8192]{0}', space=vmem, size = 0x2000, scoped, tag = 'output window, operand 0']
    %19 = vsyncpa [#allocation10], 0
    %20 = vsyncpa [#allocation9], 0
    %s21 = scalar_lea.sflag [#allocation9], 1
    %22 = vsyncpa %s21, 0
    loop: start=0, step=1, limit=6
    $region2: #{_lambda_.1} parent=1 // loop_pre_header
      _
    $region3: #{_lambda_.1} parent=1 // loop_header
      %s24 = sphi 0, %s28
      %p25 = scmp.ge.s32.totalorder %s24, 6
      %s31 = sphi 0, %s43
      %s32 = sphi 0, %s39
      %s33 = sphi 0, %s31
      %s34 = sphi 0, %s32
      %s35 = sphi 0, %s33
      %s36 = sphi 0, %s34
      %s46 = sphi 0, %s48
      %s49 = sphi 0, %s46
      %s50 = sphi 0, %s49
      %s66 = sphi 0, %s50
      %s74 = sphi 0, %s76
      %s77 = sphi 0, %s74
      %s78 = sphi 0, %s77
      %s94 = sphi 0, %s78
      %s108 = sphi 0, %s110
      %s111 = sphi 0, %s108
      %s112 = sphi 0, %s111
      %s128 = sphi 0, %s112
      %s142 = sphi 0, %s144
      %s145 = sphi 0, %s142
      %s146 = sphi 0, %s145
      %s162 = sphi 0, %s146
      %s166 = sphi 0, %s166
      %s168 = sphi 0, %s166
      %s169 = sphi 0, %s168
      %s183 = sphi 0, %s169
      %s187 = sphi 0, %s187
      %s189 = sphi 0, %s187
      %s190 = sphi 0, %s189
      %s204 = sphi 0, %s190
      %s208 = sphi 0, %s208
      %s210 = sphi 0, %s208
      %s211 = sphi 0, %s210
      %s225 = sphi 0, %s211
      %s229 = sphi 0, %s229
      %s231 = sphi 0, %s229
      %s232 = sphi 0, %s231
      %s246 = sphi 0, %s232
      %s250 = sphi 0, %s250
      %s252 = sphi 0, %s250
      %s253 = sphi 0, %s252
      %s267 = sphi 0, %s253
      %s271 = sphi 0, %s271
      %s273 = sphi 0, %s271
      %s274 = sphi 0, %s273
      %s288 = sphi 0, %s274
      %s292 = sphi 0, %s292
      %s294 = sphi 0, %s292
      %s295 = sphi 0, %s294
      %s309 = sphi 0, %s295
      %s313 = sphi 0, %s313
      %s315 = sphi 0, %s313
      %s316 = sphi 0, %s315
      %s330 = sphi 0, %s316
      %s338 = sphi 0, %s340
      %s341 = sphi 0, %s338
      %s342 = sphi 0, %s341
      %s358 = sphi 0, %s342
    $region4: #{_lambda_.1} parent=1 // loop_header_branch
      %27 = sbr.rel (%p25) target = $region8
    $region5: #{_lambda_.1} parent=1 // loop_body
      %s29 = ssub.s32 %s24, 1
      %s30 = ssub.s32 %s24, 2
      %s37 = sadd.s32 1, %s32
      %p38 = scmp.ge.s32.totalorder %s37, 2
      %s39 = scalar_select %p38, 0, %s37
      %s40 = sadd.s32 1, %s31
      %s41 = scalar_select %p38, %s40, %s31
      %p42 = scmp.ge.s32.totalorder %s41, 2
      %s43 = scalar_select %p42, 0, %s41
      %s44 = ssub.s32 %s31, %s43
      %p45 = scmp.eq.s32.totalorder %s44, 0
      %s47 = sadd.s32 %s46, 1
      %s48 = scalar_select %p45, %s46, %s47
      %p51 = pneg %p45
      %p52 = scmp.eq.s32.totalorder %s24, 3
      %p53 = por %p51, %p52
      %p54 = scmp.ne.s32.totalorder %s46, %s49
      %p55 = scmp.eq.s32.totalorder %s24, 0
      %p56 = por %p54, %p55
      %p57 = scmp.ne.s32.totalorder %s46, %s49
      %p58 = scmp.eq.s32.totalorder %s29, 3
      %p59 = por %p57, %p58
      %p60 = scmp.ne.s32.totalorder %s49, %s50
      %p61 = scmp.eq.s32.totalorder %s29, 0
      %p62 = por %p60, %p61
      %p63 = scmp.ne.s32.totalorder %s49, %s50
      %p64 = scmp.eq.s32.totalorder %s30, 3
      %p65 = por %p63, %p64
      %p67 = scmp.ne.s32.totalorder %s50, %s66
      %p68 = scmp.eq.s32.totalorder %s30, 0
      %p69 = por %p67, %p68
      %s70 = ssub.s32 %s31, %s43
      %s71 = ssub.s32 %s32, %s39
      %s72 = sor.u32 %s70, %s71
      %p73 = scmp.eq.s32.totalorder %s72, 0
      %s75 = sadd.s32 %s74, 1
      %s76 = scalar_select %p73, %s74, %s75
      %p79 = pneg %p73
      %p80 = scmp.eq.s32.totalorder %s24, 3
      %p81 = por %p79, %p80
      %p82 = scmp.ne.s32.totalorder %s74, %s77
      %p83 = scmp.eq.s32.totalorder %s24, 0
      %p84 = por %p82, %p83
      %p85 = scmp.ne.s32.totalorder %s74, %s77
      %p86 = scmp.eq.s32.totalorder %s29, 3
      %p87 = por %p85, %p86
      %p88 = scmp.ne.s32.totalorder %s77, %s78
      %p89 = scmp.eq.s32.totalorder %s29, 0
      %p90 = por %p88, %p89
      %p91 = scmp.ne.s32.totalorder %s77, %s78
      %p92 = scmp.eq.s32.totalorder %s30, 3
      %p93 = por %p91, %p92
      %p95 = scmp.ne.s32.totalorder %s78, %s94
      %p96 = scmp.eq.s32.totalorder %s30, 0
      %p97 = por %p95, %p96
      %s98 = ssub.s32 %s32, 1
      %p99 = scmp.gt.s32.totalorder %s98, 0
      %s100 = scalar_select %p99, %s98, 0
      %s101 = ssub.s32 %s39, 1
      %p102 = scmp.gt.s32.totalorder %s101, 0
      %s103 = scalar_select %p102, %s101, 0
      %s104 = ssub.s32 %s31, %s43
      %s105 = ssub.s32 %s100, %s103
      %s106 = sor.u32 %s104, %s105
      %p107 = scmp.eq.s32.totalorder %s106, 0
      %s109 = sadd.s32 %s108, 1
      %s110 = scalar_select %p107, %s108, %s109
      %p113 = pneg %p107
      %p114 = scmp.eq.s32.totalorder %s24, 3
      %p115 = por %p113, %p114
      %p116 = scmp.ne.s32.totalorder %s108, %s111
      %p117 = scmp.eq.s32.totalorder %s24, 0
      %p118 = por %p116, %p117
      %p119 = scmp.ne.s32.totalorder %s108, %s111
      %p120 = scmp.eq.s32.totalorder %s29, 3
      %p121 = por %p119, %p120
      %p122 = scmp.ne.s32.totalorder %s111, %s112
      %p123 = scmp.eq.s32.totalorder %s29, 0
      %p124 = por %p122, %p123
      %p125 = scmp.ne.s32.totalorder %s111, %s112
      %p126 = scmp.eq.s32.totalorder %s30, 3
      %p127 = por %p125, %p126
      %p129 = scmp.ne.s32.totalorder %s112, %s128
      %p130 = scmp.eq.s32.totalorder %s30, 0
      %p131 = por %p129, %p130
      %s132 = sadd.s32 %s32, 1
      %p133 = scmp.lt.s32.totalorder %s132, 1
      %s134 = scalar_select %p133, %s132, 1
      %s135 = sadd.s32 %s39, 1
      %p136 = scmp.lt.s32.totalorder %s135, 1
      %s137 = scalar_select %p136, %s135, 1
      %s138 = ssub.s32 %s31, %s43
      %s139 = ssub.s32 %s134, %s137
      %s140 = sor.u32 %s138, %s139
      %p141 = scmp.eq.s32.totalorder %s140, 0
      %s143 = sadd.s32 %s142, 1
      %s144 = scalar_select %p141, %s142, %s143
      %p147 = pneg %p141
      %p148 = scmp.eq.s32.totalorder %s24, 3
      %p149 = por %p147, %p148
      %p150 = scmp.ne.s32.totalorder %s142, %s145
      %p151 = scmp.eq.s32.totalorder %s24, 0
      %p152 = por %p150, %p151
      %p153 = scmp.ne.s32.totalorder %s142, %s145
      %p154 = scmp.eq.s32.totalorder %s29, 3
      %p155 = por %p153, %p154
      %p156 = scmp.ne.s32.totalorder %s145, %s146
      %p157 = scmp.eq.s32.totalorder %s29, 0
      %p158 = por %p156, %p157
      %p159 = scmp.ne.s32.totalorder %s145, %s146
      %p160 = scmp.eq.s32.totalorder %s30, 3
      %p161 = por %p159, %p160
      %p163 = scmp.ne.s32.totalorder %s146, %s162
      %p164 = scmp.eq.s32.totalorder %s30, 0
      %p165 = por %p163, %p164
      %s167 = sadd.s32 %s166, 1
      %p170 = scmp.eq.s32.totalorder %s24, 3
      %p171 = scmp.ne.s32.totalorder %s166, %s168
      %p172 = scmp.eq.s32.totalorder %s24, 0
      %p173 = por %p171, %p172
      %p174 = scmp.ne.s32.totalorder %s166, %s168
      %p175 = scmp.eq.s32.totalorder %s29, 3
      %p176 = por %p174, %p175
      %p177 = scmp.ne.s32.totalorder %s168, %s169
      %p178 = scmp.eq.s32.totalorder %s29, 0
      %p179 = por %p177, %p178
      %p180 = scmp.ne.s32.totalorder %s168, %s169
      %p181 = scmp.eq.s32.totalorder %s30, 3
      %p182 = por %p180, %p181
      %p184 = scmp.ne.s32.totalorder %s169, %s183
      %p185 = scmp.eq.s32.totalorder %s30, 0
      %p186 = por %p184, %p185
      %s188 = sadd.s32 %s187, 1
      %p191 = scmp.eq.s32.totalorder %s24, 3
      %p192 = scmp.ne.s32.totalorder %s187, %s189
      %p193 = scmp.eq.s32.totalorder %s24, 0
      %p194 = por %p192, %p193
      %p195 = scmp.ne.s32.totalorder %s187, %s189
      %p196 = scmp.eq.s32.totalorder %s29, 3
      %p197 = por %p195, %p196
      %p198 = scmp.ne.s32.totalorder %s189, %s190
      %p199 = scmp.eq.s32.totalorder %s29, 0
      %p200 = por %p198, %p199
      %p201 = scmp.ne.s32.totalorder %s189, %s190
      %p202 = scmp.eq.s32.totalorder %s30, 3
      %p203 = por %p201, %p202
      %p205 = scmp.ne.s32.totalorder %s190, %s204
      %p206 = scmp.eq.s32.totalorder %s30, 0
      %p207 = por %p205, %p206
      %s209 = sadd.s32 %s208, 1
      %p212 = scmp.eq.s32.totalorder %s24, 3
      %p213 = scmp.ne.s32.totalorder %s208, %s210
      %p214 = scmp.eq.s32.totalorder %s24, 0
      %p215 = por %p213, %p214
      %p216 = scmp.ne.s32.totalorder %s208, %s210
      %p217 = scmp.eq.s32.totalorder %s29, 3
      %p218 = por %p216, %p217
      %p219 = scmp.ne.s32.totalorder %s210, %s211
      %p220 = scmp.eq.s32.totalorder %s29, 0
      %p221 = por %p219, %p220
      %p222 = scmp.ne.s32.totalorder %s210, %s211
      %p223 = scmp.eq.s32.totalorder %s30, 3
      %p224 = por %p222, %p223
      %p226 = scmp.ne.s32.totalorder %s211, %s225
      %p227 = scmp.eq.s32.totalorder %s30, 0
      %p228 = por %p226, %p227
      %s230 = sadd.s32 %s229, 1
      %p233 = scmp.eq.s32.totalorder %s24, 3
      %p234 = scmp.ne.s32.totalorder %s229, %s231
      %p235 = scmp.eq.s32.totalorder %s24, 0
      %p236 = por %p234, %p235
      %p237 = scmp.ne.s32.totalorder %s229, %s231
      %p238 = scmp.eq.s32.totalorder %s29, 3
      %p239 = por %p237, %p238
      %p240 = scmp.ne.s32.totalorder %s231, %s232
      %p241 = scmp.eq.s32.totalorder %s29, 0
      %p242 = por %p240, %p241
      %p243 = scmp.ne.s32.totalorder %s231, %s232
      %p244 = scmp.eq.s32.totalorder %s30, 3
      %p245 = por %p243, %p244
      %p247 = scmp.ne.s32.totalorder %s232, %s246
      %p248 = scmp.eq.s32.totalorder %s30, 0
      %p249 = por %p247, %p248
      %s251 = sadd.s32 %s250, 1
      %p254 = scmp.eq.s32.totalorder %s24, 3
      %p255 = scmp.ne.s32.totalorder %s250, %s252
      %p256 = scmp.eq.s32.totalorder %s24, 0
      %p257 = por %p255, %p256
      %p258 = scmp.ne.s32.totalorder %s250, %s252
      %p259 = scmp.eq.s32.totalorder %s29, 3
      %p260 = por %p258, %p259
      %p261 = scmp.ne.s32.totalorder %s252, %s253
      %p262 = scmp.eq.s32.totalorder %s29, 0
      %p263 = por %p261, %p262
      %p264 = scmp.ne.s32.totalorder %s252, %s253
      %p265 = scmp.eq.s32.totalorder %s30, 3
      %p266 = por %p264, %p265
      %p268 = scmp.ne.s32.totalorder %s253, %s267
      %p269 = scmp.eq.s32.totalorder %s30, 0
      %p270 = por %p268, %p269
      %s272 = sadd.s32 %s271, 1
      %p275 = scmp.eq.s32.totalorder %s24, 3
      %p276 = scmp.ne.s32.totalorder %s271, %s273
      %p277 = scmp.eq.s32.totalorder %s24, 0
      %p278 = por %p276, %p277
      %p279 = scmp.ne.s32.totalorder %s271, %s273
      %p280 = scmp.eq.s32.totalorder %s29, 3
      %p281 = por %p279, %p280
      %p282 = scmp.ne.s32.totalorder %s273, %s274
      %p283 = scmp.eq.s32.totalorder %s29, 0
      %p284 = por %p282, %p283
      %p285 = scmp.ne.s32.totalorder %s273, %s274
      %p286 = scmp.eq.s32.totalorder %s30, 3
      %p287 = por %p285, %p286
      %p289 = scmp.ne.s32.totalorder %s274, %s288
      %p290 = scmp.eq.s32.totalorder %s30, 0
      %p291 = por %p289, %p290
      %s293 = sadd.s32 %s292, 1
      %p296 = scmp.eq.s32.totalorder %s24, 3
      %p297 = scmp.ne.s32.totalorder %s292, %s294
      %p298 = scmp.eq.s32.totalorder %s24, 0
      %p299 = por %p297, %p298
      %p300 = scmp.ne.s32.totalorder %s292, %s294
      %p301 = scmp.eq.s32.totalorder %s29, 3
      %p302 = por %p300, %p301
      %p303 = scmp.ne.s32.totalorder %s294, %s295
      %p304 = scmp.eq.s32.totalorder %s29, 0
      %p305 = por %p303, %p304
      %p306 = scmp.ne.s32.totalorder %s294, %s295
      %p307 = scmp.eq.s32.totalorder %s30, 3
      %p308 = por %p306, %p307
      %p310 = scmp.ne.s32.totalorder %s295, %s309
      %p311 = scmp.eq.s32.totalorder %s30, 0
      %p312 = por %p310, %p311
      %s314 = sadd.s32 %s313, 1
      %p317 = scmp.eq.s32.totalorder %s24, 3
      %p318 = scmp.ne.s32.totalorder %s313, %s315
      %p319 = scmp.eq.s32.totalorder %s24, 0
      %p320 = por %p318, %p319
      %p321 = scmp.ne.s32.totalorder %s313, %s315
      %p322 = scmp.eq.s32.totalorder %s29, 3
      %p323 = por %p321, %p322
      %p324 = scmp.ne.s32.totalorder %s315, %s316
      %p325 = scmp.eq.s32.totalorder %s29, 0
      %p326 = por %p324, %p325
      %p327 = scmp.ne.s32.totalorder %s315, %s316
      %p328 = scmp.eq.s32.totalorder %s30, 3
      %p329 = por %p327, %p328
      %p331 = scmp.ne.s32.totalorder %s316, %s330
      %p332 = scmp.eq.s32.totalorder %s30, 0
      %p333 = por %p331, %p332
      %s334 = ssub.s32 %s31, %s43
      %s335 = ssub.s32 %s32, %s39
      %s336 = sor.u32 %s334, %s335
      %p337 = scmp.eq.s32.totalorder %s336, 0
      %s339 = sadd.s32 %s338, 1
      %s340 = scalar_select %p337, %s338, %s339
      %p343 = pneg %p337
      %p344 = scmp.eq.s32.totalorder %s24, 3
      %p345 = por %p343, %p344
      %p346 = scmp.ne.s32.totalorder %s338, %s341
      %p347 = scmp.eq.s32.totalorder %s24, 0
      %p348 = por %p346, %p347
      %p349 = scmp.ne.s32.totalorder %s338, %s341
      %p350 = scmp.eq.s32.totalorder %s29, 3
      %p351 = por %p349, %p350
      %p352 = scmp.ne.s32.totalorder %s341, %s342
      %p353 = scmp.eq.s32.totalorder %s29, 0
      %p354 = por %p352, %p353
      %p355 = scmp.ne.s32.totalorder %s341, %s342
      %p356 = scmp.eq.s32.totalorder %s30, 3
      %p357 = por %p355, %p356
      %p359 = scmp.ne.s32.totalorder %s342, %s358
      %p360 = scmp.eq.s32.totalorder %s30, 0
      %p361 = por %p359, %p360
      %p362 = scmp.le.s32.totalorder 1, %s24
      %p363 = scmp.lt.s32.totalorder %s24, 5
      %p364 = pnand %p362, %p363
      %p365 = pneg %p364
      // Predicated region
      $region9: #{_lambda_.1} parent=5 // pred_check
        _
      $region10: #{_lambda_.1} parent=5 // pred_check_branch
        %367 = sbr.rel (%p364) target = $region12
      $region11: #{_lambda_.1} parent=5 // pred_region
        %s368 = ssub.s32 %s24, 1
        // Predicated region
        $region13: #{_lambda_.1} parent=11 // pred_check
          %p369 = pneg %p179
        $region14: #{_lambda_.1} parent=11 // pred_check_branch
          %371 = sbr.rel (%p369) target = $region16
        $region15: #{_lambda_.1} parent=11 // pred_region
          _
        $region16: #{_lambda_.1} parent=11 // pred_fallthru
          _
        // Predicated region
        $region17: #{_lambda_.1} parent=11 // pred_check
          %p372 = pneg %p200
        $region18: #{_lambda_.1} parent=11 // pred_check_branch
          %374 = sbr.rel (%p372) target = $region20
        $region19: #{_lambda_.1} parent=11 // pred_region
          _
        $region20: #{_lambda_.1} parent=11 // pred_fallthru
          _
        // Predicated region
        $region21: #{_lambda_.1} parent=11 // pred_check
          %p375 = pneg %p221
        $region22: #{_lambda_.1} parent=11 // pred_check_branch
          %377 = sbr.rel (%p375) target = $region24
        $region23: #{_lambda_.1} parent=11 // pred_region
          _
        $region24: #{_lambda_.1} parent=11 // pred_fallthru
          _
        // Predicated region
        $region25: #{_lambda_.1} parent=11 // pred_check
          %p378 = pneg %p242
        $region26: #{_lambda_.1} parent=11 // pred_check_branch
          %380 = sbr.rel (%p378) target = $region28
        $region27: #{_lambda_.1} parent=11 // pred_region
          _
        $region28: #{_lambda_.1} parent=11 // pred_fallthru
          _
        // Predicated region
        $region29: #{_lambda_.1} parent=11 // pred_check
          %p381 = pneg %p263
        $region30: #{_lambda_.1} parent=11 // pred_check_branch
          %383 = sbr.rel (%p381) target = $region32
        $region31: #{_lambda_.1} parent=11 // pred_region
          _
        $region32: #{_lambda_.1} parent=11 // pred_fallthru
          _
        // Predicated region
        $region33: #{_lambda_.1} parent=11 // pred_check
          %p384 = pneg %p284
        $region34: #{_lambda_.1} parent=11 // pred_check_branch
          %386 = sbr.rel (%p384) target = $region36
        $region35: #{_lambda_.1} parent=11 // pred_region
          %s388 = ssub.s32 64, 64
          %389 = vsyncadd [#allocation10], %s388
          %s391 = sshll.u32 %s9, 4
          %s392 = int_to_ptr.vmem [resolvable:$true] %s391
          %394 = dma.vmem_to_smem %s392, 64, [#allocation8], [#allocation10]
        $region36: #{_lambda_.1} parent=11 // pred_fallthru
          _
        // Predicated region
        $region37: #{_lambda_.1} parent=11 // pred_check
          %p395 = pneg %p305
        $region38: #{_lambda_.1} parent=11 // pred_check_branch
          %397 = sbr.rel (%p395) target = $region40
        $region39: #{_lambda_.1} parent=11 // pred_region
          _
        $region40: #{_lambda_.1} parent=11 // pred_fallthru
          _
        // Predicated region
        $region41: #{_lambda_.1} parent=11 // pred_check
          %p398 = pneg %p326
        $region42: #{_lambda_.1} parent=11 // pred_check_branch
          %400 = sbr.rel (%p398) target = $region44
        $region43: #{_lambda_.1} parent=11 // pred_region
          _
        $region44: #{_lambda_.1} parent=11 // pred_fallthru
          _
      $region12: #{_lambda_.1} parent=5 // pred_fallthru
        _
      %p401 = scmp.lt.s32.totalorder %s24, 4
      // Predicated region
      $region45: #{_lambda_.1} parent=5 // pred_check
        %p402 = pneg %p401
      $region46: #{_lambda_.1} parent=5 // pred_check_branch
        %404 = sbr.rel (%p402) target = $region48
      $region47: #{_lambda_.1} parent=5 // pred_region
        // Predicated region
        $region49: #{_lambda_.1} parent=47 // pred_check
          %p405 = pneg %p56
        $region50: #{_lambda_.1} parent=47 // pred_check_branch
          %407 = sbr.rel (%p405) target = $region52
        $region51: #{_lambda_.1} parent=47 // pred_region
          %p408 = scmp.lt.s32.totalorder %s31, 1
          %s409 = scalar_select %p408, %s31, 1
          %s410 = smul.addr %s409, 2
          %s411 = smul.addr %s410, 8
          %s412 = scalar_lea.vmem %s0, %s411
        $region52: #{_lambda_.1} parent=47 // pred_fallthru
          _
        // Predicated region
        $region53: #{_lambda_.1} parent=47 // pred_check
          %p413 = pneg %p84
        $region54: #{_lambda_.1} parent=47 // pred_check_branch
          %415 = sbr.rel (%p413) target = $region56
        $region55: #{_lambda_.1} parent=47 // pred_region
          %s416 = sand.u32 %s74, 1
          %s417 = sand.u32 %s74, 1
          %s418 = smul.addr %s417, 64
          %s419 = scalar_lea.vmem [#allocation5], %s418
          %s420 = smul.addr %s31, 16
          %s421 = sadd.s32 %s32, %s420
          %s422 = smul.addr %s421, 8
          %s423 = scalar_lea.vmem %s1, %s422
          // Predicated region
          $region57: #{_lambda_.1} parent=55 // pred_check
            _
          $region58: #{_lambda_.1} parent=55 // pred_check_branch
            %425 = sbr.rel (0) target = $region60
          $region59: #{_lambda_.1} parent=55 // pred_region
            // Predicated region
            $region61: #{_lambda_.1} parent=59 // pred_check
              _
            $region62: #{_lambda_.1} parent=59 // pred_check_branch
              %427 = sbr.rel (0) target = $region64
            $region63: #{_lambda_.1} parent=59 // pred_region
              // Predicated region
              $region76: #{_lambda_.1} parent=63 // pred_check
                _
              $region77: #{_lambda_.1} parent=63 // pred_check_branch
                %457 = sbr.rel (0) target = $region79
              $region78: #{_lambda_.1} parent=63 // pred_region
                loop: start=0, step=1, limit=1
                $region80: #{_lambda_.1} parent=78 // loop_pre_header
                  _
                $region81: #{_lambda_.1} parent=78 // loop_header
                  %s459 = sphi 0, %s463
                  %p460 = scmp.ge.s32.totalorder %s459, 1
                  %s464 = sphi %s423, %s423
                  %s465 = sphi %s419, %s419
                $region82: #{_lambda_.1} parent=78 // loop_header_branch
                  %462 = sbr.rel (%p460) target = $region86
                $region83: #{_lambda_.1} parent=78 // loop_body
                  %v466 = vld [vmem:[%s464] sm:$0xff]
                  %467 = vst [vmem:[%s465] sm:$0xff] %v466
                  %v468 = vld [vmem:[%s464 + $0x10] sm:$0xff]
                  %469 = vst [vmem:[%s465 + $0x8] sm:$0xff] %v468
                  %v470 = vld [vmem:[%s464 + $0x20] sm:$0xff]
                  %471 = vst [vmem:[%s465 + $0x10] sm:$0xff] %v470
                  %v472 = vld [vmem:[%s464 + $0x30] sm:$0xff]
                  %473 = vst [vmem:[%s465 + $0x18] sm:$0xff] %v472
                  %v474 = vld [vmem:[%s464 + $0x40] sm:$0xff]
                  %475 = vst [vmem:[%s465 + $0x20] sm:$0xff] %v474
                  %v476 = vld [vmem:[%s464 + $0x50] sm:$0xff]
                  %477 = vst [vmem:[%s465 + $0x28] sm:$0xff] %v476
                  %v478 = vld [vmem:[%s464 + $0x60] sm:$0xff]
                  %479 = vst [vmem:[%s465 + $0x30] sm:$0xff] %v478
                  %v480 = vld [vmem:[%s464 + $0x70] sm:$0xff]
                  %481 = vst [vmem:[%s465 + $0x38] sm:$0xff] %v480
                $region84: #{_lambda_.1} parent=78 // loop_footer
                  %s463 = sadd.s32 1, %s459
                $region85: #{_lambda_.1} parent=78 // loop_footer_branch
                  %458 = sbr.rel target = $region81
                $region86: #{_lambda_.1} parent=78 // loop_exit
                  _
              $region79: #{_lambda_.1} parent=63 // pred_fallthru
                _
              // Predicated region
              $region87: #{_lambda_.1} parent=63 // pred_check
                _
              $region88: #{_lambda_.1} parent=63 // pred_check_branch
                %483 = sbr.rel target = $region90
              $region89: #{_lambda_.1} parent=63 // pred_region
                _
              $region90: #{_lambda_.1} parent=63 // pred_fallthru
                _
            $region64: #{_lambda_.1} parent=59 // pred_fallthru
              _
            // Predicated region
            $region65: #{_lambda_.1} parent=59 // pred_check
              _
            $region66: #{_lambda_.1} parent=59 // pred_check_branch
              %429 = sbr.rel target = $region68
            $region67: #{_lambda_.1} parent=59 // pred_region
              %s431 = ssub.s32 256, 1
              loop: start=0, step=1, limit=1
              $region69: #{_lambda_.1} parent=67 // loop_pre_header
                _
              $region70: #{_lambda_.1} parent=67 // loop_header
                %s433 = sphi 0, %s437
                %p434 = scmp.ge.s32.totalorder %s433, 1
                %s438 = sphi %s423, %s423
                %s439 = sphi %s419, %s419
              $region71: #{_lambda_.1} parent=67 // loop_header_branch
                %436 = sbr.rel (%p434) target = $region75
              $region72: #{_lambda_.1} parent=67 // loop_body
                %v440 = vld [vmem:[%s438] sm:%s431]
                %441 = vst [vmem:[%s439] sm:%s431] %v440
                %v442 = vld [vmem:[%s438 + $0x10] sm:%s431]
                %443 = vst [vmem:[%s439 + $0x8] sm:%s431] %v442
                %v444 = vld [vmem:[%s438 + $0x20] sm:%s431]
                %445 = vst [vmem:[%s439 + $0x10] sm:%s431] %v444
                %v446 = vld [vmem:[%s438 + $0x30] sm:%s431]
                %447 = vst [vmem:[%s439 + $0x18] sm:%s431] %v446
                %v448 = vld [vmem:[%s438 + $0x40] sm:%s431]
                %449 = vst [vmem:[%s439 + $0x20] sm:%s431] %v448
                %v450 = vld [vmem:[%s438 + $0x50] sm:%s431]
                %451 = vst [vmem:[%s439 + $0x28] sm:%s431] %v450
                %v452 = vld [vmem:[%s438 + $0x60] sm:%s431]
                %453 = vst [vmem:[%s439 + $0x30] sm:%s431] %v452
                %v454 = vld [vmem:[%s438 + $0x70] sm:%s431]
                %455 = vst [vmem:[%s439 + $0x38] sm:%s431] %v454
              $region73: #{_lambda_.1} parent=67 // loop_footer
                %s437 = sadd.s32 1, %s433
              $region74: #{_lambda_.1} parent=67 // loop_footer_branch
                %432 = sbr.rel target = $region70
              $region75: #{_lambda_.1} parent=67 // loop_exit
                _
            $region68: #{_lambda_.1} parent=59 // pred_fallthru
              _
          $region60: #{_lambda_.1} parent=55 // pred_fallthru
            _
          %484 = vnop
        $region56: #{_lambda_.1} parent=47 // pred_fallthru
          _
        // Predicated region
        $region91: #{_lambda_.1} parent=47 // pred_check
          %p485 = pneg %p118
        $region92: #{_lambda_.1} parent=47 // pred_check_branch
          %487 = sbr.rel (%p485) target = $region94
        $region93: #{_lambda_.1} parent=47 // pred_region
          %s488 = sand.u32 %s108, 1
          %s489 = sand.u32 %s108, 1
          %s490 = smul.addr %s489, 64
          %s491 = scalar_lea.vmem [#allocation6], %s490
          %s492 = ssub.s32 %s32, 1
          %p493 = scmp.gt.s32.totalorder %s492, 0
          %s494 = scalar_select %p493, %s492, 0
          %s495 = smul.addr %s31, 16
          %s496 = sadd.s32 %s494, %s495
          %s497 = smul.addr %s496, 8
          %s498 = scalar_lea.vmem %s2, %s497
          // Predicated region
          $region95: #{_lambda_.1} parent=93 // pred_check
            _
          $region96: #{_lambda_.1} parent=93 // pred_check_branch
            %500 = sbr.rel (0) target = $region98
          $region97: #{_lambda_.1} parent=93 // pred_region
            // Predicated region
            $region99: #{_lambda_.1} parent=97 // pred_check
              _
            $region100: #{_lambda_.1} parent=97 // pred_check_branch
              %502 = sbr.rel (0) target = $region102
            $region101: #{_lambda_.1} parent=97 // pred_region
              // Predicated region
              $region114: #{_lambda_.1} parent=101 // pred_check
                _
              $region115: #{_lambda_.1} parent=101 // pred_check_branch
                %532 = sbr.rel (0) target = $region117
              $region116: #{_lambda_.1} parent=101 // pred_region
                loop: start=0, step=1, limit=1
                $region118: #{_lambda_.1} parent=116 // loop_pre_header
                  _
                $region119: #{_lambda_.1} parent=116 // loop_header
                  %s534 = sphi 0, %s538
                  %p535 = scmp.ge.s32.totalorder %s534, 1
                  %s539 = sphi %s498, %s498
                  %s540 = sphi %s491, %s491
                $region120: #{_lambda_.1} parent=116 // loop_header_branch
                  %537 = sbr.rel (%p535) target = $region124
                $region121: #{_lambda_.1} parent=116 // loop_body
                  %v541 = vld [vmem:[%s539] sm:$0xff]
                  %542 = vst [vmem:[%s540] sm:$0xff] %v541
                  %v543 = vld [vmem:[%s539 + $0x10] sm:$0xff]
                  %544 = vst [vmem:[%s540 + $0x8] sm:$0xff] %v543
                  %v545 = vld [vmem:[%s539 + $0x20] sm:$0xff]
                  %546 = vst [vmem:[%s540 + $0x10] sm:$0xff] %v545
                  %v547 = vld [vmem:[%s539 + $0x30] sm:$0xff]
                  %548 = vst [vmem:[%s540 + $0x18] sm:$0xff] %v547
                  %v549 = vld [vmem:[%s539 + $0x40] sm:$0xff]
                  %550 = vst [vmem:[%s540 + $0x20] sm:$0xff] %v549
                  %v551 = vld [vmem:[%s539 + $0x50] sm:$0xff]
                  %552 = vst [vmem:[%s540 + $0x28] sm:$0xff] %v551
                  %v553 = vld [vmem:[%s539 + $0x60] sm:$0xff]
                  %554 = vst [vmem:[%s540 + $0x30] sm:$0xff] %v553
                  %v555 = vld [vmem:[%s539 + $0x70] sm:$0xff]
                  %556 = vst [vmem:[%s540 + $0x38] sm:$0xff] %v555
                $region122: #{_lambda_.1} parent=116 // loop_footer
                  %s538 = sadd.s32 1, %s534
                $region123: #{_lambda_.1} parent=116 // loop_footer_branch
                  %533 = sbr.rel target = $region119
                $region124: #{_lambda_.1} parent=116 // loop_exit
                  _
              $region117: #{_lambda_.1} parent=101 // pred_fallthru
                _
              // Predicated region
              $region125: #{_lambda_.1} parent=101 // pred_check
                _
              $region126: #{_lambda_.1} parent=101 // pred_check_branch
                %558 = sbr.rel target = $region128
              $region127: #{_lambda_.1} parent=101 // pred_region
                _
              $region128: #{_lambda_.1} parent=101 // pred_fallthru
                _
            $region102: #{_lambda_.1} parent=97 // pred_fallthru
              _
            // Predicated region
            $region103: #{_lambda_.1} parent=97 // pred_check
              _
            $region104: #{_lambda_.1} parent=97 // pred_check_branch
              %504 = sbr.rel target = $region106
            $region105: #{_lambda_.1} parent=97 // pred_region
              %s506 = ssub.s32 256, 1
              loop: start=0, step=1, limit=1
              $region107: #{_lambda_.1} parent=105 // loop_pre_header
                _
              $region108: #{_lambda_.1} parent=105 // loop_header
                %s508 = sphi 0, %s512
                %p509 = scmp.ge.s32.totalorder %s508, 1
                %s513 = sphi %s498, %s498
                %s514 = sphi %s491, %s491
              $region109: #{_lambda_.1} parent=105 // loop_header_branch
                %511 = sbr.rel (%p509) target = $region113
              $region110: #{_lambda_.1} parent=105 // loop_body
                %v515 = vld [vmem:[%s513] sm:%s506]
                %516 = vst [vmem:[%s514] sm:%s506] %v515
                %v517 = vld [vmem:[%s513 + $0x10] sm:%s506]
                %518 = vst [vmem:[%s514 + $0x8] sm:%s506] %v517
                %v519 = vld [vmem:[%s513 + $0x20] sm:%s506]
                %520 = vst [vmem:[%s514 + $0x10] sm:%s506] %v519
                %v521 = vld [vmem:[%s513 + $0x30] sm:%s506]
                %522 = vst [vmem:[%s514 + $0x18] sm:%s506] %v521
                %v523 = vld [vmem:[%s513 + $0x40] sm:%s506]
                %524 = vst [vmem:[%s514 + $0x20] sm:%s506] %v523
                %v525 = vld [vmem:[%s513 + $0x50] sm:%s506]
                %526 = vst [vmem:[%s514 + $0x28] sm:%s506] %v525
                %v527 = vld [vmem:[%s513 + $0x60] sm:%s506]
                %528 = vst [vmem:[%s514 + $0x30] sm:%s506] %v527
                %v529 = vld [vmem:[%s513 + $0x70] sm:%s506]
                %530 = vst [vmem:[%s514 + $0x38] sm:%s506] %v529
              $region111: #{_lambda_.1} parent=105 // loop_footer
                %s512 = sadd.s32 1, %s508
              $region112: #{_lambda_.1} parent=105 // loop_footer_branch
                %507 = sbr.rel target = $region108
              $region113: #{_lambda_.1} parent=105 // loop_exit
                _
            $region106: #{_lambda_.1} parent=97 // pred_fallthru
              _
          $region98: #{_lambda_.1} parent=93 // pred_fallthru
            _
          %559 = vnop
        $region94: #{_lambda_.1} parent=47 // pred_fallthru
          _
        // Predicated region
        $region129: #{_lambda_.1} parent=47 // pred_check
          %p560 = pneg %p152
        $region130: #{_lambda_.1} parent=47 // pred_check_branch
          %562 = sbr.rel (%p560) target = $region132
        $region131: #{_lambda_.1} parent=47 // pred_region
          %s563 = sand.u32 %s142, 1
          %s564 = sand.u32 %s142, 1
          %s565 = smul.addr %s564, 64
          %s566 = scalar_lea.vmem [#allocation7], %s565
          %s567 = sadd.s32 %s32, 1
          %p568 = scmp.lt.s32.totalorder %s567, 1
          %s569 = scalar_select %p568, %s567, 1
          %s570 = smul.addr %s31, 16
          %s571 = sadd.s32 %s569, %s570
          %s572 = smul.addr %s571, 8
          %s573 = scalar_lea.vmem %s3, %s572
          // Predicated region
          $region133: #{_lambda_.1} parent=131 // pred_check
            _
          $region134: #{_lambda_.1} parent=131 // pred_check_branch
            %575 = sbr.rel (0) target = $region136
          $region135: #{_lambda_.1} parent=131 // pred_region
            // Predicated region
            $region137: #{_lambda_.1} parent=135 // pred_check
              _
            $region138: #{_lambda_.1} parent=135 // pred_check_branch
              %577 = sbr.rel (0) target = $region140
            $region139: #{_lambda_.1} parent=135 // pred_region
              // Predicated region
              $region152: #{_lambda_.1} parent=139 // pred_check
                _
              $region153: #{_lambda_.1} parent=139 // pred_check_branch
                %607 = sbr.rel (0) target = $region155
              $region154: #{_lambda_.1} parent=139 // pred_region
                loop: start=0, step=1, limit=1
                $region156: #{_lambda_.1} parent=154 // loop_pre_header
                  _
                $region157: #{_lambda_.1} parent=154 // loop_header
                  %s609 = sphi 0, %s613
                  %p610 = scmp.ge.s32.totalorder %s609, 1
                  %s614 = sphi %s573, %s573
                  %s615 = sphi %s566, %s566
                $region158: #{_lambda_.1} parent=154 // loop_header_branch
                  %612 = sbr.rel (%p610) target = $region162
                $region159: #{_lambda_.1} parent=154 // loop_body
                  %v616 = vld [vmem:[%s614] sm:$0xff]
                  %617 = vst [vmem:[%s615] sm:$0xff] %v616
                  %v618 = vld [vmem:[%s614 + $0x10] sm:$0xff]
                  %619 = vst [vmem:[%s615 + $0x8] sm:$0xff] %v618
                  %v620 = vld [vmem:[%s614 + $0x20] sm:$0xff]
                  %621 = vst [vmem:[%s615 + $0x10] sm:$0xff] %v620
                  %v622 = vld [vmem:[%s614 + $0x30] sm:$0xff]
                  %623 = vst [vmem:[%s615 + $0x18] sm:$0xff] %v622
                  %v624 = vld [vmem:[%s614 + $0x40] sm:$0xff]
                  %625 = vst [vmem:[%s615 + $0x20] sm:$0xff] %v624
                  %v626 = vld [vmem:[%s614 + $0x50] sm:$0xff]
                  %627 = vst [vmem:[%s615 + $0x28] sm:$0xff] %v626
                  %v628 = vld [vmem:[%s614 + $0x60] sm:$0xff]
                  %629 = vst [vmem:[%s615 + $0x30] sm:$0xff] %v628
                  %v630 = vld [vmem:[%s614 + $0x70] sm:$0xff]
                  %631 = vst [vmem:[%s615 + $0x38] sm:$0xff] %v630
                $region160: #{_lambda_.1} parent=154 // loop_footer
                  %s613 = sadd.s32 1, %s609
                $region161: #{_lambda_.1} parent=154 // loop_footer_branch
                  %608 = sbr.rel target = $region157
                $region162: #{_lambda_.1} parent=154 // loop_exit
                  _
              $region155: #{_lambda_.1} parent=139 // pred_fallthru
                _
              // Predicated region
              $region163: #{_lambda_.1} parent=139 // pred_check
                _
              $region164: #{_lambda_.1} parent=139 // pred_check_branch
                %633 = sbr.rel target = $region166
              $region165: #{_lambda_.1} parent=139 // pred_region
                _
              $region166: #{_lambda_.1} parent=139 // pred_fallthru
                _
            $region140: #{_lambda_.1} parent=135 // pred_fallthru
              _
            // Predicated region
            $region141: #{_lambda_.1} parent=135 // pred_check
              _
            $region142: #{_lambda_.1} parent=135 // pred_check_branch
              %579 = sbr.rel target = $region144
            $region143: #{_lambda_.1} parent=135 // pred_region
              %s581 = ssub.s32 256, 1
              loop: start=0, step=1, limit=1
              $region145: #{_lambda_.1} parent=143 // loop_pre_header
                _
              $region146: #{_lambda_.1} parent=143 // loop_header
                %s583 = sphi 0, %s587
                %p584 = scmp.ge.s32.totalorder %s583, 1
                %s588 = sphi %s573, %s573
                %s589 = sphi %s566, %s566
              $region147: #{_lambda_.1} parent=143 // loop_header_branch
                %586 = sbr.rel (%p584) target = $region151
              $region148: #{_lambda_.1} parent=143 // loop_body
                %v590 = vld [vmem:[%s588] sm:%s581]
                %591 = vst [vmem:[%s589] sm:%s581] %v590
                %v592 = vld [vmem:[%s588 + $0x10] sm:%s581]
                %593 = vst [vmem:[%s589 + $0x8] sm:%s581] %v592
                %v594 = vld [vmem:[%s588 + $0x20] sm:%s581]
                %595 = vst [vmem:[%s589 + $0x10] sm:%s581] %v594
                %v596 = vld [vmem:[%s588 + $0x30] sm:%s581]
                %597 = vst [vmem:[%s589 + $0x18] sm:%s581] %v596
                %v598 = vld [vmem:[%s588 + $0x40] sm:%s581]
                %599 = vst [vmem:[%s589 + $0x20] sm:%s581] %v598
                %v600 = vld [vmem:[%s588 + $0x50] sm:%s581]
                %601 = vst [vmem:[%s589 + $0x28] sm:%s581] %v600
                %v602 = vld [vmem:[%s588 + $0x60] sm:%s581]
                %603 = vst [vmem:[%s589 + $0x30] sm:%s581] %v602
                %v604 = vld [vmem:[%s588 + $0x70] sm:%s581]
                %605 = vst [vmem:[%s589 + $0x38] sm:%s581] %v604
              $region149: #{_lambda_.1} parent=143 // loop_footer
                %s587 = sadd.s32 1, %s583
              $region150: #{_lambda_.1} parent=143 // loop_footer_branch
                %582 = sbr.rel target = $region146
              $region151: #{_lambda_.1} parent=143 // loop_exit
                _
            $region144: #{_lambda_.1} parent=135 // pred_fallthru
              _
          $region136: #{_lambda_.1} parent=131 // pred_fallthru
            _
          %634 = vnop
        $region132: #{_lambda_.1} parent=47 // pred_fallthru
          _
      $region48: #{_lambda_.1} parent=5 // pred_fallthru
        _
      %p635 = scmp.le.s32.totalorder 1, %s24
      %p636 = scmp.lt.s32.totalorder %s24, 5
      %p637 = pnand %p635, %p636
      %p638 = pneg %p637
      // Predicated region
      $region167: #{_lambda_.1} parent=5 // pred_check
        _
      $region168: #{_lambda_.1} parent=5 // pred_check_branch
        %640 = sbr.rel (%p637) target = $region170
      $region169: #{_lambda_.1} parent=5 // pred_region
        %s641 = ssub.s32 %s24, 1
        %s642 = sand.u32 %s77, 1
        %s643 = sand.u32 %s77, 1
        %s644 = smul.addr %s643, 64
        %s645 = scalar_lea.vmem [#allocation5], %s644
        // Predicated region
        $region171: #{_lambda_.1} parent=169 // pred_check
          %p646 = pneg %p90
        $region172: #{_lambda_.1} parent=169 // pred_check_branch
          %648 = sbr.rel (%p646) target = $region174
        $region173: #{_lambda_.1} parent=169 // pred_region
          _
        $region174: #{_lambda_.1} parent=169 // pred_fallthru
          _
        %s649 = sand.u32 %s111, 1
        %s650 = sand.u32 %s111, 1
        %s651 = smul.addr %s650, 64
        %s652 = scalar_lea.vmem [#allocation6], %s651
        // Predicated region
        $region175: #{_lambda_.1} parent=169 // pred_check
          %p653 = pneg %p124
        $region176: #{_lambda_.1} parent=169 // pred_check_branch
          %655 = sbr.rel (%p653) target = $region178
        $region177: #{_lambda_.1} parent=169 // pred_region
          _
        $region178: #{_lambda_.1} parent=169 // pred_fallthru
          _
        %s656 = sand.u32 %s145, 1
        %s657 = sand.u32 %s145, 1
        %s658 = smul.addr %s657, 64
        %s659 = scalar_lea.vmem [#allocation7], %s658
        // Predicated region
        $region179: #{_lambda_.1} parent=169 // pred_check
          %p660 = pneg %p158
        $region180: #{_lambda_.1} parent=169 // pred_check_branch
          %662 = sbr.rel (%p660) target = $region182
        $region181: #{_lambda_.1} parent=169 // pred_region
          _
        $region182: #{_lambda_.1} parent=169 // pred_fallthru
          _
        // Predicated region
        $region183: #{_lambda_.1} parent=169 // pred_check
          %p663 = pneg %p284
        $region184: #{_lambda_.1} parent=169 // pred_check_branch
          %665 = sbr.rel (%p663) target = $region186
        $region185: #{_lambda_.1} parent=169 // pred_region
          %666 = dma.done [#allocation10], 64
        $region186: #{_lambda_.1} parent=169 // pred_fallthru
          _
        %667 = sfence
        %p668 = scmp.lt.s32.totalorder %s33, 1
        %s669 = scalar_select %p668, %s33, 1
        %s670 = smul.addr %s669, 2
        %s671 = smul.addr %s670, 8
        %s672 = scalar_lea.vmem %s0, %s671
        %p673 = pneg %p62
        %p674 = pneg %p59
        %s675 = sand.u32 %s77, 1
        %s676 = sand.u32 %s77, 1
        %s677 = smul.addr %s676, 64
        %s678 = scalar_lea.vmem [#allocation5], %s677
        %p679 = pneg %p90
        %p680 = pneg %p87
        %s681 = sand.u32 %s111, 1
        %s682 = sand.u32 %s111, 1
        %s683 = smul.addr %s682, 64
        %s684 = scalar_lea.vmem [#allocation6], %s683
        %p685 = pneg %p124
        %p686 = pneg %p121
        %s687 = sand.u32 %s145, 1
        %s688 = sand.u32 %s145, 1
        %s689 = smul.addr %s688, 64
        %s690 = scalar_lea.vmem [#allocation7], %s689
        %p691 = pneg %p158
        %p692 = pneg %p155
        %p693 = pneg %p179
        %p694 = pneg %p176
        %p695 = pneg %p200
        %p696 = pneg %p197
        %p697 = pneg %p221
        %p698 = pneg %p218
        %p699 = pneg %p242
        %p700 = pneg %p239
        %p701 = pneg %p263
        %p702 = pneg %p260
        %p703 = pneg %p284
        %p704 = pneg %p281
        %p705 = pneg %p305
        %p706 = pneg %p302
        %p707 = pneg %p326
        %p708 = pneg %p323
        %p709 = pneg %p354
        %p710 = pneg %p351
        %s711 = sand.u32 %s341, 1
        %s712 = scalar_lea.sflag [#allocation9], %s711
        %s713 = sand.u32 %s341, 1
        %s714 = smul.addr %s713, 8
        %s715 = scalar_lea.vmem [#allocation11], %s714
        %p716 = scmp.lt.s32.totalorder %s33, 1
        %s717 = scalar_select %p716, %s33, 1
        %s718 = smul.addr %s717, 2
        %s719 = smul.addr %s718, 8
        %s720 = scalar_lea.vmem %s0, %s719
        %s721 = ssub.s32 %s34, 1
        %p722 = scmp.gt.s32.totalorder %s721, 0
        %s723 = scalar_select %p722, %s721, 0
        %s724 = sadd.s32 %s34, 1
        %p725 = scmp.lt.s32.totalorder %s724, 1
        %s726 = scalar_select %p725, %s724, 1
        %v727 = vld [vmem:[%s4] sm:$0xff]
        %v728 = vld [vmem:[%s4 + $0x8] sm:$0x1]
        %v729 = vld [vmem:[%s645] sm:$0xff]
        %v730 = vld [vmem:[%s645 + $0x8] sm:$0xff]
        %v731 = vld [vmem:[%s645 + $0x10] sm:$0xff]
        %v732 = vld [vmem:[%s645 + $0x18] sm:$0xff]
        %v733 = vld [vmem:[%s645 + $0x20] sm:$0xff]
        %v734 = vld [vmem:[%s645 + $0x28] sm:$0xff]
        %v735 = vld [vmem:[%s645 + $0x30] sm:$0xff]
        %v736 = vld [vmem:[%s645 + $0x38] sm:$0xff]
        %vm737 = vcmask 523264
        %v739 = vsel %vm737, %v727, 0
        %v742 = vsel %vm737, %v728, 0
        %744 = vmatprep.subr.mxu0 0.0
        %745 = vmatpush1.msra.mxu0 0.0
        %746 = vmatprep.subr.mxu0 0.0
        %747 = vmatpush1.msra.mxu0 0.0
        %748 = vmatprep.subr.mxu0 0.0
        %749 = vmatpush1.msra.mxu0 0.0
        %750 = vmatprep.subr.mxu0 0.0
        %751 = vmatpush1.msra.mxu0 0.0
        %752 = vmatprep.subr.mxu0 0.0
        %753 = vmatpush1.msra.mxu0 0.0
        %754 = vmatprep.subr.mxu0 0.0
        %755 = vmatpush1.msra.mxu0 0.0
        %756 = vmatprep.subr.mxu0 0.0
        %757 = vmatpush1.msra.mxu0 0.0
        %758 = vmatprep.subr.mxu0 0.0
        %759 = vmatpush1.msra.mxu0 0.0
        %760 = vmatprep.subr.mxu0 0.0
        %761 = vmatpush1.msra.mxu0 %v736
        %762 = vmatprep.subr.mxu0 0.0
        %763 = vmatpush1.msra.mxu0 %v735
        %764 = vmatprep.subr.mxu0 0.0
        %765 = vmatpush1.msra.mxu0 %v734
        %766 = vmatprep.subr.mxu0 0.0
        %767 = vmatpush1.msra.mxu0 %v733
        %768 = vmatprep.subr.mxu0 0.0
        %769 = vmatpush1.msra.mxu0 %v732
        %770 = vmatprep.subr.mxu0 0.0
        %771 = vmatpush1.msra.mxu0 %v731
        %772 = vmatprep.subr.mxu0 0.0
        %773 = vmatpush1.msra.mxu0 %v730
        %774 = vmatprep.subr.mxu0 0.0
        %775 = vmatpush1.msra.mxu0 %v729
        %776 = vmatprep.subr.mxu0 0.0
        %777 = vmatpush2.msra.mxu0 0.0
        %778 = vmatprep.subr.mxu0 0.0
        %779 = vmatpush2.msra.mxu0 0.0
        %780 = vmatprep.subr.mxu0 0.0
        %781 = vmatpush2.msra.mxu0 0.0
        %782 = vmatprep.subr.mxu0 0.0
        %783 = vmatpush2.msra.mxu0 0.0
        %784 = vmatprep.subr.mxu0 0.0
        %785 = vmatpush2.msra.mxu0 0.0
        %786 = vmatprep.subr.mxu0 0.0
        %787 = vmatpush2.msra.mxu0 0.0
        %788 = vmatprep.subr.mxu0 0.0
        %789 = vmatpush2.msra.mxu0 0.0
        %790 = vmatprep.subr.mxu0 0.0
        %791 = vmatpush2.msra.mxu0 0.0
        %792 = vmatprep.subr.mxu0 0.0
        %793 = vmatpush2.msra.mxu0 0.0
        %794 = vmatprep.subr.mxu0 0.0
        %795 = vmatpush2.msra.mxu0 0.0
        %796 = vmatprep.subr.mxu0 0.0
        %797 = vmatpush2.msra.mxu0 0.0
        %798 = vmatprep.subr.mxu0 0.0
        %799 = vmatpush2.msra.mxu0 0.0
        %800 = vmatprep.subr.mxu0 0.0
        %801 = vmatpush2.msra.mxu0 0.0
        %802 = vmatprep.subr.mxu0 0.0
        %803 = vmatpush2.msra.mxu0 0.0
        %804 = vmatprep.subr.mxu0 0.0
        %805 = vmatpush2.msra.mxu0 0.0
        %806 = vmatprep.subr.mxu0 0.0
        %807 = vmatpush2.msra.mxu0 0.0
        %808 = vmatprep.mubr.f32.mxu0 0.0
        %809 = vmatmul.mubr.f32.gmra.mxu0 %v739
        %v810 = vpop.f32.mrf.mxu0
        %v811 = vadd.f32 0.0, %v810
        %v812 = vpop.f32.mrf.mxu0
        %813 = vmatprep.mubr.f32.mxu0 0.0
        %814 = vmatmul.mubr.f32.gmra.mxu0 %v742
        %v815 = vpop.f32.mrf.mxu0
        %v816 = vadd.f32 0.0, %v815
        %v817 = vpop.f32.mrf.mxu0
        %818 = vdwg.mxu0
        %v819 = vld [vmem:[%s652] sm:$0xff]
        %v820 = vld [vmem:[%s652 + $0x8] sm:$0xff]
        %v821 = vld [vmem:[%s652 + $0x10] sm:$0xff]
        %v822 = vld [vmem:[%s652 + $0x18] sm:$0xff]
        %v823 = vld [vmem:[%s652 + $0x20] sm:$0xff]
        %v824 = vld [vmem:[%s652 + $0x28] sm:$0xff]
        %v825 = vld [vmem:[%s652 + $0x30] sm:$0xff]
        %v826 = vld [vmem:[%s652 + $0x38] sm:$0xff]
        %v827 = vld [vmem:[%s659] sm:$0xff]
        %v828 = vld [vmem:[%s659 + $0x8] sm:$0xff]
        %v829 = vld [vmem:[%s659 + $0x10] sm:$0xff]
        %v830 = vld [vmem:[%s659 + $0x18] sm:$0xff]
        %v831 = vld [vmem:[%s659 + $0x20] sm:$0xff]
        %v832 = vld [vmem:[%s659 + $0x28] sm:$0xff]
        %v833 = vld [vmem:[%s659 + $0x30] sm:$0xff]
        %v834 = vld [vmem:[%s659 + $0x38] sm:$0xff]
        %843 = vrot.lane.b32.xlu0 %v819, 16
        %v844 = vpop.permute.xlu0 %843
        %845 = vrot.lane.b32.xlu0 %v820, 16
        %v846 = vpop.permute.xlu0 %845
        %847 = vrot.lane.b32.xlu0 %v821, 16
        %v848 = vpop.permute.xlu0 %847
        %849 = vrot.lane.b32.xlu0 %v822, 16
        %v850 = vpop.permute.xlu0 %849
        %851 = vrot.lane.b32.xlu0 %v823, 16
        %v852 = vpop.permute.xlu0 %851
        %853 = vrot.lane.b32.xlu0 %v824, 16
        %v854 = vpop.permute.xlu0 %853
        %855 = vrot.lane.b32.xlu0 %v825, 16
        %v856 = vpop.permute.xlu0 %855
        %857 = vrot.lane.b32.xlu0 %v826, 16
        %v858 = vpop.permute.xlu0 %857
        %867 = vmatprep.subr.mxu0 0.0
        %868 = vmatpush1.msra.mxu0 0.0
        %869 = vmatprep.subr.mxu0 0.0
        %870 = vmatpush1.msra.mxu0 0.0
        %871 = vmatprep.subr.mxu0 0.0
        %872 = vmatpush1.msra.mxu0 0.0
        %873 = vmatprep.subr.mxu0 0.0
        %874 = vmatpush1.msra.mxu0 0.0
        %875 = vmatprep.subr.mxu0 0.0
        %876 = vmatpush1.msra.mxu0 0.0
        %877 = vmatprep.subr.mxu0 0.0
        %878 = vmatpush1.msra.mxu0 0.0
        %879 = vmatprep.subr.mxu0 0.0
        %880 = vmatpush1.msra.mxu0 0.0
        %881 = vmatprep.subr.mxu0 0.0
        %882 = vmatpush1.msra.mxu0 0.0
        %883 = vmatprep.subr.mxu0 0.0
        %884 = vmatpush1.msra.mxu0 %v858
        %885 = vmatprep.subr.mxu0 0.0
        %886 = vmatpush1.msra.mxu0 %v856
        %887 = vmatprep.subr.mxu0 0.0
        %888 = vmatpush1.msra.mxu0 %v854
        %889 = vmatprep.subr.mxu0 0.0
        %890 = vmatpush1.msra.mxu0 %v852
        %891 = vmatprep.subr.mxu0 0.0
        %892 = vmatpush1.msra.mxu0 %v850
        %893 = vmatprep.subr.mxu0 0.0
        %894 = vmatpush1.msra.mxu0 %v848
        %895 = vmatprep.subr.mxu0 0.0
        %896 = vmatpush1.msra.mxu0 %v846
        %897 = vmatprep.subr.mxu0 0.0
        %898 = vmatpush1.msra.mxu0 %v844
        %899 = vmatprep.subr.mxu0 0.0
        %900 = vmatpush2.msra.mxu0 0.0
        %901 = vmatprep.subr.mxu0 0.0
        %902 = vmatpush2.msra.mxu0 0.0
        %903 = vmatprep.subr.mxu0 0.0
        %904 = vmatpush2.msra.mxu0 0.0
        %905 = vmatprep.subr.mxu0 0.0
        %906 = vmatpush2.msra.mxu0 0.0
        %907 = vmatprep.subr.mxu0 0.0
        %908 = vmatpush2.msra.mxu0 0.0
        %909 = vmatprep.subr.mxu0 0.0
        %910 = vmatpush2.msra.mxu0 0.0
        %911 = vmatprep.subr.mxu0 0.0
        %912 = vmatpush2.msra.mxu0 0.0
        %913 = vmatprep.subr.mxu0 0.0
        %914 = vmatpush2.msra.mxu0 0.0
        %915 = vmatprep.subr.mxu0 0.0
        %916 = vmatpush2.msra.mxu0 0.0
        %917 = vmatprep.subr.mxu0 0.0
        %918 = vmatpush2.msra.mxu0 0.0
        %919 = vmatprep.subr.mxu0 0.0
        %920 = vmatpush2.msra.mxu0 0.0
        %921 = vmatprep.subr.mxu0 0.0
        %922 = vmatpush2.msra.mxu0 0.0
        %923 = vmatprep.subr.mxu0 0.0
        %924 = vmatpush2.msra.mxu0 0.0
        %925 = vmatprep.subr.mxu0 0.0
        %926 = vmatpush2.msra.mxu0 0.0
        %927 = vmatprep.subr.mxu0 0.0
        %928 = vmatpush2.msra.mxu0 0.0
        %929 = vmatprep.subr.mxu0 0.0
        %930 = vmatpush2.msra.mxu0 0.0
        %931 = vmatprep.mubr.f32.mxu0 0.0
        %932 = vmatmul.mubr.f32.gmra.mxu0 %v739
        %v933 = vpop.f32.mrf.mxu0
        %v934 = vadd.f32 0.0, %v933
        %v935 = vpop.f32.mrf.mxu0
        %936 = vmatprep.mubr.f32.mxu0 0.0
        %937 = vmatmul.mubr.f32.gmra.mxu0 %v742
        %v938 = vpop.f32.mrf.mxu0
        %v939 = vadd.f32 0.0, %v938
        %v940 = vpop.f32.mrf.mxu0
        %941 = vdwg.mxu0
        %942 = vmatprep.subr.mxu0 0.0
        %943 = vmatpush1.msra.mxu0 0.0
        %944 = vmatprep.subr.mxu0 0.0
        %945 = vmatpush1.msra.mxu0 0.0
        %946 = vmatprep.subr.mxu0 0.0
        %947 = vmatpush1.msra.mxu0 0.0
        %948 = vmatprep.subr.mxu0 0.0
        %949 = vmatpush1.msra.mxu0 0.0
        %950 = vmatprep.subr.mxu0 0.0
        %951 = vmatpush1.msra.mxu0 0.0
        %952 = vmatprep.subr.mxu0 0.0
        %953 = vmatpush1.msra.mxu0 0.0
        %954 = vmatprep.subr.mxu0 0.0
        %955 = vmatpush1.msra.mxu0 0.0
        %956 = vmatprep.subr.mxu0 0.0
        %957 = vmatpush1.msra.mxu0 0.0
        %958 = vmatprep.subr.mxu0 0.0
        %959 = vmatpush1.msra.mxu0 %v834
        %960 = vmatprep.subr.mxu0 0.0
        %961 = vmatpush1.msra.mxu0 %v833
        %962 = vmatprep.subr.mxu0 0.0
        %963 = vmatpush1.msra.mxu0 %v832
        %964 = vmatprep.subr.mxu0 0.0
        %965 = vmatpush1.msra.mxu0 %v831
        %966 = vmatprep.subr.mxu0 0.0
        %967 = vmatpush1.msra.mxu0 %v830
        %968 = vmatprep.subr.mxu0 0.0
        %969 = vmatpush1.msra.mxu0 %v829
        %970 = vmatprep.subr.mxu0 0.0
        %971 = vmatpush1.msra.mxu0 %v828
        %972 = vmatprep.subr.mxu0 0.0
        %973 = vmatpush1.msra.mxu0 %v827
        %974 = vmatprep.subr.mxu0 0.0
        %975 = vmatpush2.msra.mxu0 0.0
        %976 = vmatprep.subr.mxu0 0.0
        %977 = vmatpush2.msra.mxu0 0.0
        %978 = vmatprep.subr.mxu0 0.0
        %979 = vmatpush2.msra.mxu0 0.0
        %980 = vmatprep.subr.mxu0 0.0
        %981 = vmatpush2.msra.mxu0 0.0
        %982 = vmatprep.subr.mxu0 0.0
        %983 = vmatpush2.msra.mxu0 0.0
        %984 = vmatprep.subr.mxu0 0.0
        %985 = vmatpush2.msra.mxu0 0.0
        %986 = vmatprep.subr.mxu0 0.0
        %987 = vmatpush2.msra.mxu0 0.0
        %988 = vmatprep.subr.mxu0 0.0
        %989 = vmatpush2.msra.mxu0 0.0
        %990 = vmatprep.subr.mxu0 0.0
        %991 = vmatpush2.msra.mxu0 0.0
        %992 = vmatprep.subr.mxu0 0.0
        %993 = vmatpush2.msra.mxu0 0.0
        %994 = vmatprep.subr.mxu0 0.0
        %995 = vmatpush2.msra.mxu0 0.0
        %996 = vmatprep.subr.mxu0 0.0
        %997 = vmatpush2.msra.mxu0 0.0
        %998 = vmatprep.subr.mxu0 0.0
        %999 = vmatpush2.msra.mxu0 0.0
        %1000 = vmatprep.subr.mxu0 0.0
        %1001 = vmatpush2.msra.mxu0 0.0
        %1002 = vmatprep.subr.mxu0 0.0
        %1003 = vmatpush2.msra.mxu0 0.0
        %1004 = vmatprep.subr.mxu0 0.0
        %1005 = vmatpush2.msra.mxu0 0.0
        %1006 = vmatprep.mubr.f32.mxu0 0.0
        %1007 = vmatmul.mubr.f32.gmra.mxu0 %v739
        %v1008 = vpop.f32.mrf.mxu0
        %v1009 = vadd.f32 0.0, %v1008
        %v1010 = vpop.f32.mrf.mxu0
        %1011 = vmatprep.mubr.f32.mxu0 0.0
        %1012 = vmatmul.mubr.f32.gmra.mxu0 %v742
        %v1013 = vpop.f32.mrf.mxu0
        %v1014 = vadd.f32 0.0, %v1013
        %v1015 = vpop.f32.mrf.mxu0
        %1016 = vdwg.mxu0
        %p1017 = scmp.gt.s32.totalorder %s34, 0
        %s1018 = scalar_select %p1017, 1, 0
        %v1019 = vstv %s1018
        %vm1020 = vcmp.eq.s32.totalorder %v1019, 1
        %v1021 = vsel %vm1020, %v934, 0.0
        %v1022 = vsel %vm1020, %v939, 0.0
        %p1023 = scmp.lt.s32.totalorder %s34, 1
        %s1024 = scalar_select %p1023, 1, 0
        %v1025 = vstv %s1024
        %vm1026 = vcmp.eq.s32.totalorder %v1025, 1
        %v1027 = vsel %vm1026, %v1009, 0.0
        %v1028 = vsel %vm1026, %v1014, 0.0
        %1031 = vrot.lane.b32.xlu0 %v1021, 16
        %v1032 = vpop.permute.xlu0 %1031
        %1033 = vrot.lane.b32.xlu0 %v1022, 16
        %v1034 = vpop.permute.xlu0 %1033
        %vm1037 = vcmask 261248
        %1038 = vst.msk [vmem:[#allocation2] sm:$0xff] %vm1037, %v1032
        %vm1039 = vcmask 254080
        %1040 = vst.msk [vmem:[#allocation2 + $0x10] sm:$0x1] %vm1039, %v1034
        %1043 = vrot.lane.b32.xlu0 %v811, 32
        %v1044 = vpop.permute.xlu0 %1043
        %1045 = vrot.lane.b32.xlu0 %v816, 32
        %v1046 = vpop.permute.xlu0 %1045
        %vm1049 = vcmask 1047808
        %1050 = vst.msk [vmem:[#allocation2] sm:$0xff] %vm1049, %v1044
        %vm1051 = vcmask 261120
        %1052 = vst.msk [vmem:[#allocation2 + $0x8] sm:$0xff] %vm1051, %v1044
        %vm1053 = vcmask 1040640
        %1054 = vst.msk [vmem:[#allocation2 + $0x10] sm:$0x1] %vm1053, %v1046
        %vm1055 = vcmask 253952
        %1056 = vst.msk [vmem:[#allocation2 + $0x18] sm:$0x1] %vm1055, %v1046
        %1059 = vrot.lane.b32.xlu0 %v1027, 32
        %v1060 = vpop.permute.xlu0 %1059
        %1061 = vrot.lane.b32.xlu0 %v1028, 32
        %v1062 = vpop.permute.xlu0 %1061
        %vm1065 = vcmask 392448
        %1066 = vst.msk [vmem:[#allocation2 + $0x8] sm:$0xff] %vm1065, %v1060
        %vm1067 = vcmask 385280
        %1068 = vst.msk [vmem:[#allocation2 + $0x18] sm:$0x1] %vm1067, %v1062
        %v1069 = vlaneseq
        %v1070 = vand.u32 %v1069, 127
        %vm1071 = vcmp.lt.s32.totalorder %v1070, 0
        %v1072 = vsub.s32 0, %v1070
        %v1073 = vsel %vm1071, %v1072, %v1070
        %v1074 = vshrl.u32 %v1073, 4
        %v1075 = vand.u32 %v1073, 15
        %v1076 = vsub.s32 0, %v1075
        %v1077 = vsel %vm1071, %v1076, %v1075
        %vm1078 = vcmp.ne.s32.totalorder %v1077, 0
        %vm1079 = vcmp.lt.s32.totalorder %v1077, 0
        %vm1080 = vmand %vm1079, %vm1078
        %v1081 = vadd.s32 %v1077, 16
        %v1082 = vsel %vm1080, %v1081, %v1077
        %vm1083 = vcmp.eq.s32.totalorder %v1082, 0
        %vm1084 = vcmp.eq.s32.totalorder %v1082, 15
        %v1085 = vld [vmem:[#allocation2] ss:$0 sm:$0xff]
        %v1086 = vld [vmem:[#allocation2 + $0x8] ss:$0 sm:$0xff]
        %1089 = vrot.lane.b32.xlu0 %v1085, 113
        %v1090 = vpop.permute.xlu0 %1089
        %1091 = vrot.lane.b32.xlu0 %v1086, 113
        %v1092 = vpop.permute.xlu0 %1091
        %vm1093 = vcmask 924672
        %v1094 = vsel %vm1093, %v1090, %v1092
        %v1096 = vsel %vm1083, 0.0, %v1094
        %v1097 = vadd.f32 %v1096, 0.0
        %v1098 = vld [vmem:[#allocation2 + $0x1] ss:$0 sm:$0xff]
        %v1099 = vld [vmem:[#allocation2 + $0x9] ss:$0 sm:$0xff]
        %1102 = vrot.lane.b32.xlu0 %v1098, 112
        %v1103 = vpop.permute.xlu0 %1102
        %1104 = vrot.lane.b32.xlu0 %v1099, 112
        %v1105 = vpop.permute.xlu0 %1104
        %vm1106 = vcmask 916480
        %v1107 = vsel %vm1106, %v1103, %v1105
        %v1109 = vadd.f32 %v1097, %v1107
        %v1110 = vld [vmem:[#allocation2 + $0x2] ss:$0 sm:$0xff]
        %v1111 = vld [vmem:[#allocation2 + $0xa] ss:$0 sm:$0xff]
        %1114 = vrot.lane.b32.xlu0 %v1110, 111
        %v1115 = vpop.permute.xlu0 %1114
        %1116 = vrot.lane.b32.xlu0 %v1111, 111
        %v1117 = vpop.permute.xlu0 %1116
        %vm1118 = vcmask 908288
        %v1119 = vsel %vm1118, %v1115, %v1117
        %v1121 = vsel %vm1084, 0.0, %v1119
        %v1122 = vadd.f32 %v1109, %v1121
        %v1123 = vld [vmem:[#allocation2 + $0x3] ss:$0 sm:$0xff]
        %v1124 = vld [vmem:[#allocation2 + $0xb] ss:$0 sm:$0xff]
        %1127 = vrot.lane.b32.xlu0 %v1123, 97
        %v1128 = vpop.permute.xlu0 %1127
        %1129 = vrot.lane.b32.xlu0 %v1124, 97
        %v1130 = vpop.permute.xlu0 %1129
        %vm1131 = vcmask 793600
        %v1132 = vsel %vm1131, %v1128, %v1130
        %v1134 = vsel %vm1083, 0.0, %v1132
        %v1135 = vadd.f32 %v1122, %v1134
        %v1136 = vld [vmem:[#allocation2 + $0x4] ss:$0 sm:$0xff]
        %v1137 = vld [vmem:[#allocation2 + $0xc] ss:$0 sm:$0xff]
        %1140 = vrot.lane.b32.xlu0 %v1136, 96
        %v1141 = vpop.permute.xlu0 %1140
        %1142 = vrot.lane.b32.xlu0 %v1137, 96
        %v1143 = vpop.permute.xlu0 %1142
        %vm1144 = vcmask 785408
        %v1145 = vsel %vm1144, %v1141, %v1143
        %v1147 = vadd.f32 %v1135, %v1145
        %v1148 = vld [vmem:[#allocation2 + $0x5] ss:$0 sm:$0xff]
        %v1149 = vld [vmem:[#allocation2 + $0xd] ss:$0 sm:$0xff]
        %1152 = vrot.lane.b32.xlu0 %v1148, 95
        %v1153 = vpop.permute.xlu0 %1152
        %1154 = vrot.lane.b32.xlu0 %v1149, 95
        %v1155 = vpop.permute.xlu0 %1154
        %vm1156 = vcmask 777216
        %v1157 = vsel %vm1156, %v1153, %v1155
        %v1159 = vsel %vm1084, 0.0, %v1157
        %v1160 = vadd.f32 %v1147, %v1159
        %v1161 = vld [vmem:[#allocation2 + $0x6] ss:$0 sm:$0xff]
        %v1162 = vld [vmem:[#allocation2 + $0xe] ss:$0 sm:$0xff]
        %1165 = vrot.lane.b32.xlu0 %v1161, 81
        %v1166 = vpop.permute.xlu0 %1165
        %1167 = vrot.lane.b32.xlu0 %v1162, 81
        %v1168 = vpop.permute.xlu0 %1167
        %vm1169 = vcmask 662528
        %v1170 = vsel %vm1169, %v1166, %v1168
        %v1172 = vsel %vm1083, 0.0, %v1170
        %v1173 = vadd.f32 %v1160, %v1172
        %v1174 = vld [vmem:[#allocation2 + $0x7] ss:$0 sm:$0xff]
        %v1175 = vld [vmem:[#allocation2 + $0xf] ss:$0 sm:$0xff]
        %1178 = vrot.lane.b32.xlu0 %v1174, 80
        %v1179 = vpop.permute.xlu0 %1178
        %1180 = vrot.lane.b32.xlu0 %v1175, 80
        %v1181 = vpop.permute.xlu0 %1180
        %vm1182 = vcmask 654336
        %v1183 = vsel %vm1182, %v1179, %v1181
        %v1185 = vadd.f32 %v1173, %v1183
        %v1186 = vld [vmem:[#allocation2 + $0x10] ss:$0 sm:$0xff]
        %v1187 = vld [vmem:[#allocation2 + $0x18] ss:$0 sm:$0xff]
        %1190 = vrot.lane.b32.xlu0 %v1186, 79
        %v1191 = vpop.permute.xlu0 %1190
        %1192 = vrot.lane.b32.xlu0 %v1187, 79
        %v1193 = vpop.permute.xlu0 %1192
        %vm1194 = vcmask 646144
        %v1195 = vsel %vm1194, %v1191, %v1193
        %v1197 = vsel %vm1084, 0.0, %v1195
        %v1198 = vadd.f32 %v1185, %v1197
        %s1199 = smul.u32 %s34, 4
        %s1200 = sld [smem:[#allocation8 + $0x81]]
        %s1201 = sadd.s32 %s1199, 1
        %s1202 = scalar_lea.vmem %s720, %s1201
        %v1203 = vld [vmem:[%s1202] sm:$0xf]
        %v1204 = vstv %s1200
        %v1205 = vmul.f32 %v1204, %v1203
        %v1206 = vadd.f32 %v1205, 0.0
        %s1207 = sld [smem:[#allocation8 + $0x83]]
        %v1208 = vstv %s1207
        %v1209 = vmul.f32 %v1208, %v1203
        %1211 = vrot.lane.b32.xlu0 %v1209, 1
        %v1212 = vpop.permute.xlu0 %1211
        %v1214 = vadd.f32 %v1206, %v1212
        %s1215 = sld [smem:[#allocation8 + $0x181]]
        %s1216 = scalar_lea.vmem %s720, %s1199
        %v1217 = vld [vmem:[%s1216] sm:$0xf]
        %v1218 = vstv %s1215
        %v1219 = vmul.f32 %v1218, %v1217
        %v1220 = vadd.f32 %v1214, %v1219
        %s1221 = sld [smem:[#allocation8 + $0x183]]
        %v1222 = vstv %s1221
        %v1223 = vmul.f32 %v1222, %v1217
        %1225 = vrot.lane.b32.xlu0 %v1223, 1
        %v1226 = vpop.permute.xlu0 %1225
        %v1228 = vadd.f32 %v1220, %v1226
        %s1229 = sld [smem:[#allocation8 + $0x80]]
        %v1230 = vstv %s1229
        %v1231 = vmul.f32 %v1230, %v1203
        %v1232 = vadd.f32 %v1231, 0.0
        %s1233 = sld [smem:[#allocation8 + $0x82]]
        %v1234 = vstv %s1233
        %v1235 = vmul.f32 %v1234, %v1203
        %1237 = vrot.lane.b32.xlu0 %v1235, 1
        %v1238 = vpop.permute.xlu0 %1237
        %v1240 = vadd.f32 %v1232, %v1238
        %s1241 = sld [smem:[#allocation8 + $0x180]]
        %v1242 = vstv %s1241
        %v1243 = vmul.f32 %v1242, %v1217
        %v1244 = vadd.f32 %v1240, %v1243
        %s1245 = sld [smem:[#allocation8 + $0x182]]
        %v1246 = vstv %s1245
        %v1247 = vmul.f32 %v1246, %v1217
        %1249 = vrot.lane.b32.xlu0 %v1247, 1
        %v1250 = vpop.permute.xlu0 %1249
        %v1252 = vadd.f32 %v1244, %v1250
        %s1253 = sld [smem:[#allocation8 + $0x1]]
        %s1254 = sadd.s32 %s1199, 2
        %s1255 = scalar_lea.vmem %s720, %s1254
        %v1256 = vld [vmem:[%s1255] sm:$0xf]
        %v1257 = vstv %s1253
        %v1258 = vmul.f32 %v1257, %v1256
        %v1259 = vadd.f32 %v1258, 0.0
        %s1260 = sld [smem:[#allocation8 + $0x3]]
        %v1261 = vstv %s1260
        %v1262 = vmul.f32 %v1261, %v1256
        %1264 = vrot.lane.b32.xlu0 %v1262, 1
        %v1265 = vpop.permute.xlu0 %1264
        %v1267 = vadd.f32 %v1259, %v1265
        %s1268 = sld [smem:[#allocation8 + $0x101]]
        %v1269 = vstv %s1268
        %v1270 = vmul.f32 %v1269, %v1203
        %v1271 = vadd.f32 %v1267, %v1270
        %s1272 = sld [smem:[#allocation8 + $0x103]]
        %v1273 = vstv %s1272
        %v1274 = vmul.f32 %v1273, %v1203
        %1276 = vrot.lane.b32.xlu0 %v1274, 1
        %v1277 = vpop.permute.xlu0 %1276
        %v1279 = vadd.f32 %v1271, %v1277
        %s1280 = sld [smem:[#allocation8]]
        %v1281 = vstv %s1280
        %v1282 = vmul.f32 %v1281, %v1256
        %v1283 = vadd.f32 %v1282, 0.0
        %s1284 = sld [smem:[#allocation8 + $0x2]]
        %v1285 = vstv %s1284
        %v1286 = vmul.f32 %v1285, %v1256
        %1288 = vrot.lane.b32.xlu0 %v1286, 1
        %v1289 = vpop.permute.xlu0 %1288
        %v1291 = vadd.f32 %v1283, %v1289
        %s1292 = sld [smem:[#allocation8 + $0x100]]
        %v1293 = vstv %s1292
        %v1294 = vmul.f32 %v1293, %v1203
        %v1295 = vadd.f32 %v1291, %v1294
        %s1296 = sld [smem:[#allocation8 + $0x102]]
        %v1297 = vstv %s1296
        %v1298 = vmul.f32 %v1297, %v1203
        %1300 = vrot.lane.b32.xlu0 %v1298, 1
        %v1301 = vpop.permute.xlu0 %1300
        %v1303 = vadd.f32 %v1295, %v1301
        %v1304 = vld [vmem:[%s5] sm:$0xff]
        %v1305 = vld [vmem:[%s6] sm:$0xff]
        %1307 = vrot.lane.b32.xlu0 %v1252, 126
        %v1308 = vpop.permute.xlu0 %1307
        %vm1309 = vcmask 64512
        %v1310 = vsel %vm1309, %v1308, 0
        %1312 = vmatprep.subr.mxu0 0.0
        %1313 = vmatpush1.msra.mxu0 0.0
        %1314 = vmatprep.subr.mxu0 0.0
        %1315 = vmatpush1.msra.mxu0 0.0
        %1316 = vmatprep.subr.mxu0 0.0
        %1317 = vmatpush1.msra.mxu0 0.0
        %1318 = vmatprep.subr.mxu0 0.0
        %1319 = vmatpush1.msra.mxu0 0.0
        %1320 = vmatprep.subr.mxu0 0.0
        %1321 = vmatpush1.msra.mxu0 0.0
        %1322 = vmatprep.subr.mxu0 0.0
        %1323 = vmatpush1.msra.mxu0 0.0
        %1324 = vmatprep.subr.mxu0 0.0
        %1325 = vmatpush1.msra.mxu0 0.0
        %1326 = vmatprep.subr.mxu0 0.0
        %1327 = vmatpush1.msra.mxu0 0.0
        %1328 = vmatprep.subr.mxu0 0.0
        %1329 = vmatpush1.msra.mxu0 0.0
        %1330 = vmatprep.subr.mxu0 0.0
        %1331 = vmatpush1.msra.mxu0 0.0
        %1332 = vmatprep.subr.mxu0 0.0
        %1333 = vmatpush1.msra.mxu0 0.0
        %1334 = vmatprep.subr.mxu0 0.0
        %1335 = vmatpush1.msra.mxu0 0.0
        %1336 = vmatprep.subr.mxu0 0.0
        %1337 = vmatpush1.msra.mxu0 0.0
        %1338 = vmatprep.subr.mxu0 0.0
        %1339 = vmatpush1.msra.mxu0 0.0
        %1340 = vmatprep.subr.mxu0 0.0
        %1341 = vmatpush1.msra.mxu0 0.0
        %1342 = vmatprep.subr.mxu0 0.0
        %1343 = vmatpush1.msra.mxu0 %v1305
        %1344 = vmatprep.subr.mxu0 0.0
        %1345 = vmatpush2.msra.mxu0 0.0
        %1346 = vmatprep.subr.mxu0 0.0
        %1347 = vmatpush2.msra.mxu0 0.0
        %1348 = vmatprep.subr.mxu0 0.0
        %1349 = vmatpush2.msra.mxu0 0.0
        %1350 = vmatprep.subr.mxu0 0.0
        %1351 = vmatpush2.msra.mxu0 0.0
        %1352 = vmatprep.subr.mxu0 0.0
        %1353 = vmatpush2.msra.mxu0 0.0
        %1354 = vmatprep.subr.mxu0 0.0
        %1355 = vmatpush2.msra.mxu0 0.0
        %1356 = vmatprep.subr.mxu0 0.0
        %1357 = vmatpush2.msra.mxu0 0.0
        %1358 = vmatprep.subr.mxu0 0.0
        %1359 = vmatpush2.msra.mxu0 0.0
        %1360 = vmatprep.subr.mxu0 0.0
        %1361 = vmatpush2.msra.mxu0 0.0
        %1362 = vmatprep.subr.mxu0 0.0
        %1363 = vmatpush2.msra.mxu0 0.0
        %1364 = vmatprep.subr.mxu0 0.0
        %1365 = vmatpush2.msra.mxu0 0.0
        %1366 = vmatprep.subr.mxu0 0.0
        %1367 = vmatpush2.msra.mxu0 0.0
        %1368 = vmatprep.subr.mxu0 0.0
        %1369 = vmatpush2.msra.mxu0 0.0
        %1370 = vmatprep.subr.mxu0 0.0
        %1371 = vmatpush2.msra.mxu0 0.0
        %1372 = vmatprep.subr.mxu0 0.0
        %1373 = vmatpush2.msra.mxu0 0.0
        %1374 = vmatprep.subr.mxu0 0.0
        %1375 = vmatpush2.msra.mxu0 0.0
        %1376 = vmatprep.mubr.f32.mxu0 0.0
        %1377 = vmatmul.mubr.f32.gmra.mxu0 %v1310
        %v1378 = vpop.f32.mrf.mxu0
        %v1379 = vadd.f32 0.0, %v1378
        %v1380 = vpop.f32.mrf.mxu0
        %1381 = vdwg.mxu0
        %1383 = vrot.lane.b32.xlu0 %v1228, 127
        %v1384 = vpop.permute.xlu0 %1383
        %v1385 = vsel %vm1309, %v1384, 0
        %1387 = vmatprep.subr.mxu0 0.0
        %1388 = vmatpush1.msra.mxu0 0.0
        %1389 = vmatprep.subr.mxu0 0.0
        %1390 = vmatpush1.msra.mxu0 0.0
        %1391 = vmatprep.subr.mxu0 0.0
        %1392 = vmatpush1.msra.mxu0 0.0
        %1393 = vmatprep.subr.mxu0 0.0
        %1394 = vmatpush1.msra.mxu0 0.0
        %1395 = vmatprep.subr.mxu0 0.0
        %1396 = vmatpush1.msra.mxu0 0.0
        %1397 = vmatprep.subr.mxu0 0.0
        %1398 = vmatpush1.msra.mxu0 0.0
        %1399 = vmatprep.subr.mxu0 0.0
        %1400 = vmatpush1.msra.mxu0 0.0
        %1401 = vmatprep.subr.mxu0 0.0
        %1402 = vmatpush1.msra.mxu0 0.0
        %1403 = vmatprep.subr.mxu0 0.0
        %1404 = vmatpush1.msra.mxu0 0.0
        %1405 = vmatprep.subr.mxu0 0.0
        %1406 = vmatpush1.msra.mxu0 0.0
        %1407 = vmatprep.subr.mxu0 0.0
        %1408 = vmatpush1.msra.mxu0 0.0
        %1409 = vmatprep.subr.mxu0 0.0
        %1410 = vmatpush1.msra.mxu0 0.0
        %1411 = vmatprep.subr.mxu0 0.0
        %1412 = vmatpush1.msra.mxu0 0.0
        %1413 = vmatprep.subr.mxu0 0.0
        %1414 = vmatpush1.msra.mxu0 0.0
        %1415 = vmatprep.subr.mxu0 0.0
        %1416 = vmatpush1.msra.mxu0 0.0
        %1417 = vmatprep.subr.mxu0 0.0
        %1418 = vmatpush1.msra.mxu0 %v1304
        %1419 = vmatprep.subr.mxu0 0.0
        %1420 = vmatpush2.msra.mxu0 0.0
        %1421 = vmatprep.subr.mxu0 0.0
        %1422 = vmatpush2.msra.mxu0 0.0
        %1423 = vmatprep.subr.mxu0 0.0
        %1424 = vmatpush2.msra.mxu0 0.0
        %1425 = vmatprep.subr.mxu0 0.0
        %1426 = vmatpush2.msra.mxu0 0.0
        %1427 = vmatprep.subr.mxu0 0.0
        %1428 = vmatpush2.msra.mxu0 0.0
        %1429 = vmatprep.subr.mxu0 0.0
        %1430 = vmatpush2.msra.mxu0 0.0
        %1431 = vmatprep.subr.mxu0 0.0
        %1432 = vmatpush2.msra.mxu0 0.0
        %1433 = vmatprep.subr.mxu0 0.0
        %1434 = vmatpush2.msra.mxu0 0.0
        %1435 = vmatprep.subr.mxu0 0.0
        %1436 = vmatpush2.msra.mxu0 0.0
        %1437 = vmatprep.subr.mxu0 0.0
        %1438 = vmatpush2.msra.mxu0 0.0
        %1439 = vmatprep.subr.mxu0 0.0
        %1440 = vmatpush2.msra.mxu0 0.0
        %1441 = vmatprep.subr.mxu0 0.0
        %1442 = vmatpush2.msra.mxu0 0.0
        %1443 = vmatprep.subr.mxu0 0.0
        %1444 = vmatpush2.msra.mxu0 0.0
        %1445 = vmatprep.subr.mxu0 0.0
        %1446 = vmatpush2.msra.mxu0 0.0
        %1447 = vmatprep.subr.mxu0 0.0
        %1448 = vmatpush2.msra.mxu0 0.0
        %1449 = vmatprep.subr.mxu0 0.0
        %1450 = vmatpush2.msra.mxu0 0.0
        %1451 = vmatprep.mubr.f32.mxu0 0.0
        %1452 = vmatmul.mubr.f32.gmra.mxu0 %v1385
        %v1453 = vpop.f32.mrf.mxu0
        %v1454 = vadd.f32 %v1379, %v1453
        %v1455 = vpop.f32.mrf.mxu0
        %1456 = vdwg.mxu0
        %1458 = vrot.lane.b32.xlu0 %v1303, 126
        %v1459 = vpop.permute.xlu0 %1458
        %v1460 = vsel %vm1309, %v1459, 0
        %1462 = vmatprep.subr.mxu0 0.0
        %1463 = vmatpush1.msra.mxu0 0.0
        %1464 = vmatprep.subr.mxu0 0.0
        %1465 = vmatpush1.msra.mxu0 0.0
        %1466 = vmatprep.subr.mxu0 0.0
        %1467 = vmatpush1.msra.mxu0 0.0
        %1468 = vmatprep.subr.mxu0 0.0
        %1469 = vmatpush1.msra.mxu0 0.0
        %1470 = vmatprep.subr.mxu0 0.0
        %1471 = vmatpush1.msra.mxu0 0.0
        %1472 = vmatprep.subr.mxu0 0.0
        %1473 = vmatpush1.msra.mxu0 0.0
        %1474 = vmatprep.subr.mxu0 0.0
        %1475 = vmatpush1.msra.mxu0 0.0
        %1476 = vmatprep.subr.mxu0 0.0
        %1477 = vmatpush1.msra.mxu0 0.0
        %1478 = vmatprep.subr.mxu0 0.0
        %1479 = vmatpush1.msra.mxu0 0.0
        %1480 = vmatprep.subr.mxu0 0.0
        %1481 = vmatpush1.msra.mxu0 0.0
        %1482 = vmatprep.subr.mxu0 0.0
        %1483 = vmatpush1.msra.mxu0 0.0
        %1484 = vmatprep.subr.mxu0 0.0
        %1485 = vmatpush1.msra.mxu0 0.0
        %1486 = vmatprep.subr.mxu0 0.0
        %1487 = vmatpush1.msra.mxu0 0.0
        %1488 = vmatprep.subr.mxu0 0.0
        %1489 = vmatpush1.msra.mxu0 0.0
        %1490 = vmatprep.subr.mxu0 0.0
        %1491 = vmatpush1.msra.mxu0 0.0
        %1492 = vmatprep.subr.mxu0 0.0
        %1493 = vmatpush1.msra.mxu0 %v1305
        %1494 = vmatprep.subr.mxu0 0.0
        %1495 = vmatpush2.msra.mxu0 0.0
        %1496 = vmatprep.subr.mxu0 0.0
        %1497 = vmatpush2.msra.mxu0 0.0
        %1498 = vmatprep.subr.mxu0 0.0
        %1499 = vmatpush2.msra.mxu0 0.0
        %1500 = vmatprep.subr.mxu0 0.0
        %1501 = vmatpush2.msra.mxu0 0.0
        %1502 = vmatprep.subr.mxu0 0.0
        %1503 = vmatpush2.msra.mxu0 0.0
        %1504 = vmatprep.subr.mxu0 0.0
        %1505 = vmatpush2.msra.mxu0 0.0
        %1506 = vmatprep.subr.mxu0 0.0
        %1507 = vmatpush2.msra.mxu0 0.0
        %1508 = vmatprep.subr.mxu0 0.0
        %1509 = vmatpush2.msra.mxu0 0.0
        %1510 = vmatprep.subr.mxu0 0.0
        %1511 = vmatpush2.msra.mxu0 0.0
        %1512 = vmatprep.subr.mxu0 0.0
        %1513 = vmatpush2.msra.mxu0 0.0
        %1514 = vmatprep.subr.mxu0 0.0
        %1515 = vmatpush2.msra.mxu0 0.0
        %1516 = vmatprep.subr.mxu0 0.0
        %1517 = vmatpush2.msra.mxu0 0.0
        %1518 = vmatprep.subr.mxu0 0.0
        %1519 = vmatpush2.msra.mxu0 0.0
        %1520 = vmatprep.subr.mxu0 0.0
        %1521 = vmatpush2.msra.mxu0 0.0
        %1522 = vmatprep.subr.mxu0 0.0
        %1523 = vmatpush2.msra.mxu0 0.0
        %1524 = vmatprep.subr.mxu0 0.0
        %1525 = vmatpush2.msra.mxu0 0.0
        %1526 = vmatprep.mubr.f32.mxu0 0.0
        %1527 = vmatmul.mubr.f32.gmra.mxu0 %v1460
        %v1528 = vpop.f32.mrf.mxu0
        %v1529 = vadd.f32 0.0, %v1528
        %v1530 = vpop.f32.mrf.mxu0
        %1531 = vdwg.mxu0
        %1533 = vrot.lane.b32.xlu0 %v1279, 127
        %v1534 = vpop.permute.xlu0 %1533
        %v1535 = vsel %vm1309, %v1534, 0
        %1537 = vmatprep.subr.mxu0 0.0
        %1538 = vmatpush1.msra.mxu0 0.0
        %1539 = vmatprep.subr.mxu0 0.0
        %1540 = vmatpush1.msra.mxu0 0.0
        %1541 = vmatprep.subr.mxu0 0.0
        %1542 = vmatpush1.msra.mxu0 0.0
        %1543 = vmatprep.subr.mxu0 0.0
        %1544 = vmatpush1.msra.mxu0 0.0
        %1545 = vmatprep.subr.mxu0 0.0
        %1546 = vmatpush1.msra.mxu0 0.0
        %1547 = vmatprep.subr.mxu0 0.0
        %1548 = vmatpush1.msra.mxu0 0.0
        %1549 = vmatprep.subr.mxu0 0.0
        %1550 = vmatpush1.msra.mxu0 0.0
        %1551 = vmatprep.subr.mxu0 0.0
        %1552 = vmatpush1.msra.mxu0 0.0
        %1553 = vmatprep.subr.mxu0 0.0
        %1554 = vmatpush1.msra.mxu0 0.0
        %1555 = vmatprep.subr.mxu0 0.0
        %1556 = vmatpush1.msra.mxu0 0.0
        %1557 = vmatprep.subr.mxu0 0.0
        %1558 = vmatpush1.msra.mxu0 0.0
        %1559 = vmatprep.subr.mxu0 0.0
        %1560 = vmatpush1.msra.mxu0 0.0
        %1561 = vmatprep.subr.mxu0 0.0
        %1562 = vmatpush1.msra.mxu0 0.0
        %1563 = vmatprep.subr.mxu0 0.0
        %1564 = vmatpush1.msra.mxu0 0.0
        %1565 = vmatprep.subr.mxu0 0.0
        %1566 = vmatpush1.msra.mxu0 0.0
        %1567 = vmatprep.subr.mxu0 0.0
        %1568 = vmatpush1.msra.mxu0 %v1304
        %1569 = vmatprep.subr.mxu0 0.0
        %1570 = vmatpush2.msra.mxu0 0.0
        %1571 = vmatprep.subr.mxu0 0.0
        %1572 = vmatpush2.msra.mxu0 0.0
        %1573 = vmatprep.subr.mxu0 0.0
        %1574 = vmatpush2.msra.mxu0 0.0
        %1575 = vmatprep.subr.mxu0 0.0
        %1576 = vmatpush2.msra.mxu0 0.0
        %1577 = vmatprep.subr.mxu0 0.0
        %1578 = vmatpush2.msra.mxu0 0.0
        %1579 = vmatprep.subr.mxu0 0.0
        %1580 = vmatpush2.msra.mxu0 0.0
        %1581 = vmatprep.subr.mxu0 0.0
        %1582 = vmatpush2.msra.mxu0 0.0
        %1583 = vmatprep.subr.mxu0 0.0
        %1584 = vmatpush2.msra.mxu0 0.0
        %1585 = vmatprep.subr.mxu0 0.0
        %1586 = vmatpush2.msra.mxu0 0.0
        %1587 = vmatprep.subr.mxu0 0.0
        %1588 = vmatpush2.msra.mxu0 0.0
        %1589 = vmatprep.subr.mxu0 0.0
        %1590 = vmatpush2.msra.mxu0 0.0
        %1591 = vmatprep.subr.mxu0 0.0
        %1592 = vmatpush2.msra.mxu0 0.0
        %1593 = vmatprep.subr.mxu0 0.0
        %1594 = vmatpush2.msra.mxu0 0.0
        %1595 = vmatprep.subr.mxu0 0.0
        %1596 = vmatpush2.msra.mxu0 0.0
        %1597 = vmatprep.subr.mxu0 0.0
        %1598 = vmatpush2.msra.mxu0 0.0
        %1599 = vmatprep.subr.mxu0 0.0
        %1600 = vmatpush2.msra.mxu0 0.0
        %1601 = vmatprep.mubr.f32.mxu0 0.0
        %1602 = vmatmul.mubr.f32.gmra.mxu0 %v1535
        %v1603 = vpop.f32.mrf.mxu0
        %v1604 = vadd.f32 %v1529, %v1603
        %v1605 = vpop.f32.mrf.mxu0
        %1606 = vdwg.mxu0
        %v1607 = vld [vmem:[%s7] sm:$0xff]
        %v1608 = vld [vmem:[%s8] sm:$0xff]
        %vm1609 = vcmask 31744
        %v1611 = vsel %vm1609, %v1608, 0
        %vm1613 = vcmask 1043456
        %v1615 = vsel %vm1613, %v1604, 0
        %1617 = vmatprep.subr.mxu0 0.0
        %1618 = vmatpush1.msra.mxu0 0.0
        %1619 = vmatprep.subr.mxu0 0.0
        %1620 = vmatpush1.msra.mxu0 0.0
        %1621 = vmatprep.subr.mxu0 0.0
        %1622 = vmatpush1.msra.mxu0 0.0
        %1623 = vmatprep.subr.mxu0 0.0
        %1624 = vmatpush1.msra.mxu0 0.0
        %1625 = vmatprep.subr.mxu0 0.0
        %1626 = vmatpush1.msra.mxu0 0.0
        %1627 = vmatprep.subr.mxu0 0.0
        %1628 = vmatpush1.msra.mxu0 0.0
        %1629 = vmatprep.subr.mxu0 0.0
        %1630 = vmatpush1.msra.mxu0 0.0
        %1631 = vmatprep.subr.mxu0 0.0
        %1632 = vmatpush1.msra.mxu0 0.0
        %1633 = vmatprep.subr.mxu0 0.0
        %1634 = vmatpush1.msra.mxu0 0.0
        %1635 = vmatprep.subr.mxu0 0.0
        %1636 = vmatpush1.msra.mxu0 0.0
        %1637 = vmatprep.subr.mxu0 0.0
        %1638 = vmatpush1.msra.mxu0 0.0
        %1639 = vmatprep.subr.mxu0 0.0
        %1640 = vmatpush1.msra.mxu0 0.0
        %1641 = vmatprep.subr.mxu0 0.0
        %1642 = vmatpush1.msra.mxu0 0.0
        %1643 = vmatprep.subr.mxu0 0.0
        %1644 = vmatpush1.msra.mxu0 0.0
        %1645 = vmatprep.subr.mxu0 0.0
        %1646 = vmatpush1.msra.mxu0 0.0
        %1647 = vmatprep.subr.mxu0 0.0
        %1648 = vmatpush1.msra.mxu0 %v1615
        %1649 = vmatprep.subr.mxu0 0.0
        %1650 = vmatpush2.msra.mxu0 0.0
        %1651 = vmatprep.subr.mxu0 0.0
        %1652 = vmatpush2.msra.mxu0 0.0
        %1653 = vmatprep.subr.mxu0 0.0
        %1654 = vmatpush2.msra.mxu0 0.0
        %1655 = vmatprep.subr.mxu0 0.0
        %1656 = vmatpush2.msra.mxu0 0.0
        %1657 = vmatprep.subr.mxu0 0.0
        %1658 = vmatpush2.msra.mxu0 0.0
        %1659 = vmatprep.subr.mxu0 0.0
        %1660 = vmatpush2.msra.mxu0 0.0
        %1661 = vmatprep.subr.mxu0 0.0
        %1662 = vmatpush2.msra.mxu0 0.0
        %1663 = vmatprep.subr.mxu0 0.0
        %1664 = vmatpush2.msra.mxu0 0.0
        %1665 = vmatprep.subr.mxu0 0.0
        %1666 = vmatpush2.msra.mxu0 0.0
        %1667 = vmatprep.subr.mxu0 0.0
        %1668 = vmatpush2.msra.mxu0 0.0
        %1669 = vmatprep.subr.mxu0 0.0
        %1670 = vmatpush2.msra.mxu0 0.0
        %1671 = vmatprep.subr.mxu0 0.0
        %1672 = vmatpush2.msra.mxu0 0.0
        %1673 = vmatprep.subr.mxu0 0.0
        %1674 = vmatpush2.msra.mxu0 0.0
        %1675 = vmatprep.subr.mxu0 0.0
        %1676 = vmatpush2.msra.mxu0 0.0
        %1677 = vmatprep.subr.mxu0 0.0
        %1678 = vmatpush2.msra.mxu0 0.0
        %1679 = vmatprep.subr.mxu0 0.0
        %1680 = vmatpush2.msra.mxu0 0.0
        %1681 = vmatprep.mubr.f32.mxu0 0.0
        %1682 = vmatmul.mubr.f32.gmra.mxu0 %v1611
        %v1683 = vpop.f32.mrf.mxu0
        %v1684 = vadd.f32 0.0, %v1683
        %v1685 = vpop.f32.mrf.mxu0
        %1686 = vdwg.mxu0
        %v1688 = vsel %vm1609, %v1607, 0
        %v1691 = vsel %vm1613, %v1454, 0
        %1693 = vmatprep.subr.mxu0 0.0
        %1694 = vmatpush1.msra.mxu0 0.0
        %1695 = vmatprep.subr.mxu0 0.0
        %1696 = vmatpush1.msra.mxu0 0.0
        %1697 = vmatprep.subr.mxu0 0.0
        %1698 = vmatpush1.msra.mxu0 0.0
        %1699 = vmatprep.subr.mxu0 0.0
        %1700 = vmatpush1.msra.mxu0 0.0
        %1701 = vmatprep.subr.mxu0 0.0
        %1702 = vmatpush1.msra.mxu0 0.0
        %1703 = vmatprep.subr.mxu0 0.0
        %1704 = vmatpush1.msra.mxu0 0.0
        %1705 = vmatprep.subr.mxu0 0.0
        %1706 = vmatpush1.msra.mxu0 0.0
        %1707 = vmatprep.subr.mxu0 0.0
        %1708 = vmatpush1.msra.mxu0 0.0
        %1709 = vmatprep.subr.mxu0 0.0
        %1710 = vmatpush1.msra.mxu0 0.0
        %1711 = vmatprep.subr.mxu0 0.0
        %1712 = vmatpush1.msra.mxu0 0.0
        %1713 = vmatprep.subr.mxu0 0.0
        %1714 = vmatpush1.msra.mxu0 0.0
        %1715 = vmatprep.subr.mxu0 0.0
        %1716 = vmatpush1.msra.mxu0 0.0
        %1717 = vmatprep.subr.mxu0 0.0
        %1718 = vmatpush1.msra.mxu0 0.0
        %1719 = vmatprep.subr.mxu0 0.0
        %1720 = vmatpush1.msra.mxu0 0.0
        %1721 = vmatprep.subr.mxu0 0.0
        %1722 = vmatpush1.msra.mxu0 0.0
        %1723 = vmatprep.subr.mxu0 0.0
        %1724 = vmatpush1.msra.mxu0 %v1691
        %1725 = vmatprep.subr.mxu0 0.0
        %1726 = vmatpush2.msra.mxu0 0.0
        %1727 = vmatprep.subr.mxu0 0.0
        %1728 = vmatpush2.msra.mxu0 0.0
        %1729 = vmatprep.subr.mxu0 0.0
        %1730 = vmatpush2.msra.mxu0 0.0
        %1731 = vmatprep.subr.mxu0 0.0
        %1732 = vmatpush2.msra.mxu0 0.0
        %1733 = vmatprep.subr.mxu0 0.0
        %1734 = vmatpush2.msra.mxu0 0.0
        %1735 = vmatprep.subr.mxu0 0.0
        %1736 = vmatpush2.msra.mxu0 0.0
        %1737 = vmatprep.subr.mxu0 0.0
        %1738 = vmatpush2.msra.mxu0 0.0
        %1739 = vmatprep.subr.mxu0 0.0
        %1740 = vmatpush2.msra.mxu0 0.0
        %1741 = vmatprep.subr.mxu0 0.0
        %1742 = vmatpush2.msra.mxu0 0.0
        %1743 = vmatprep.subr.mxu0 0.0
        %1744 = vmatpush2.msra.mxu0 0.0
        %1745 = vmatprep.subr.mxu0 0.0
        %1746 = vmatpush2.msra.mxu0 0.0
        %1747 = vmatprep.subr.mxu0 0.0
        %1748 = vmatpush2.msra.mxu0 0.0
        %1749 = vmatprep.subr.mxu0 0.0
        %1750 = vmatpush2.msra.mxu0 0.0
        %1751 = vmatprep.subr.mxu0 0.0
        %1752 = vmatpush2.msra.mxu0 0.0
        %1753 = vmatprep.subr.mxu0 0.0
        %1754 = vmatpush2.msra.mxu0 0.0
        %1755 = vmatprep.subr.mxu0 0.0
        %1756 = vmatpush2.msra.mxu0 0.0
        %1757 = vmatprep.mubr.f32.mxu0 0.0
        %1758 = vmatmul.mubr.f32.gmra.mxu0 %v1688
        %v1759 = vpop.f32.mrf.mxu0
        %v1760 = vadd.f32 %v1684, %v1759
        %v1761 = vpop.f32.mrf.mxu0
        %1762 = vdwg.mxu0
        %s1763 = sld [smem:[#allocation3]]
        %s1764 = sld [smem:[#allocation4]]
        %s1765 = sadd.f32 %s1763, %s1764
        %v1766 = vstv %s1765
        %v1767 = vadd.f32 %v1760, %v1766
        %v1768 = vadd.f32 %v1767, %v1198
        %vm1769 = vcmask 122880
        %1770 = vst.msk [vmem:[%s715] sm:$0x1] %vm1769, %v1768
        %v1772 = vrot.slane %v1198, 7
        %1773 = vrot.lane.b32.xlu0 %v1772, 112
        %v1774 = vpop.permute.xlu0 %1773
        %v1776 = vadd.f32 %v1767, %v1774
        %vm1777 = vcmask 123905
        %1778 = vst.msk [vmem:[%s715] sm:$0x2] %vm1777, %v1776
        %v1779 = vrot.slane %v1198, 6
        %1780 = vrot.lane.b32.xlu0 %v1779, 96
        %v1781 = vpop.permute.xlu0 %1780
        %v1783 = vadd.f32 %v1767, %v1781
        %vm1784 = vcmask 124930
        %1785 = vst.msk [vmem:[%s715] sm:$0x4] %vm1784, %v1783
        %v1786 = vrot.slane %v1198, 5
        %1787 = vrot.lane.b32.xlu0 %v1786, 80
        %v1788 = vpop.permute.xlu0 %1787
        %v1790 = vadd.f32 %v1767, %v1788
        %vm1791 = vcmask 125955
        %1792 = vst.msk [vmem:[%s715] sm:$0x8] %vm1791, %v1790
        %v1793 = vrot.slane %v1198, 4
        %1794 = vrot.lane.b32.xlu0 %v1793, 64
        %v1795 = vpop.permute.xlu0 %1794
        %v1797 = vadd.f32 %v1767, %v1795
        %vm1798 = vcmask 126980
        %1799 = vst.msk [vmem:[%s715] sm:$0x10] %vm1798, %v1797
        %v1800 = vrot.slane %v1198, 3
        %1801 = vrot.lane.b32.xlu0 %v1800, 48
        %v1802 = vpop.permute.xlu0 %1801
        %v1804 = vadd.f32 %v1767, %v1802
        %vm1805 = vcmask 128005
        %1806 = vst.msk [vmem:[%s715] sm:$0x20] %vm1805, %v1804
        %v1807 = vrot.slane %v1198, 2
        %1808 = vrot.lane.b32.xlu0 %v1807, 32
        %v1809 = vpop.permute.xlu0 %1808
        %v1811 = vadd.f32 %v1767, %v1809
        %vm1812 = vcmask 129030
        %1813 = vst.msk [vmem:[%s715] sm:$0x40] %vm1812, %v1811
        %v1814 = vrot.slane %v1198, 1
        %1815 = vrot.lane.b32.xlu0 %v1814, 16
        %v1816 = vpop.permute.xlu0 %1815
        %v1818 = vadd.f32 %v1767, %v1816
        %vm1819 = vcmask 130055
        %1820 = vst.msk [vmem:[%s715] sm:$0x80] %vm1819, %v1818
        %s1821 = sand.u32 %s341, 1
        %s1822 = scalar_lea.sflag [#allocation9], %s1821
        %s1823 = sand.u32 %s341, 1
        %s1824 = smul.addr %s1823, 8
        %s1825 = scalar_lea.vmem [#allocation11], %s1824
        // Predicated region
        $region187: #{_lambda_.1} parent=169 // pred_check
          %p1826 = pneg %p351
        $region188: #{_lambda_.1} parent=169 // pred_check_branch
          %1828 = sbr.rel (%p1826) target = $region190
        $region189: #{_lambda_.1} parent=169 // pred_region
          %s1830 = ssub.s32 128, 128
          %1831 = vsyncadd %s1822, %s1830
          %s1832 = smul.addr %s33, 2
          %s1833 = sadd.s32 %s34, %s1832
          %s1834 = smul.addr %s1833, 128
          %s1835 = scalar_lea.hbm %s12, %s1834
          %s1837 = sshll.u32 %s1825, 4
          %s1838 = int_to_ptr.vmem [resolvable:$true] %s1837
          %1840 = dma.vmem_to_hbm [thread:$0]  %s1838, 128, %s1835, %s1822
        $region190: #{_lambda_.1} parent=169 // pred_fallthru
          _
      $region170: #{_lambda_.1} parent=5 // pred_fallthru
        _
      %p1841 = scmp.le.s32.totalorder 2, %s24
      // Predicated region
      $region191: #{_lambda_.1} parent=5 // pred_check
        %p1842 = pneg %p1841
      $region192: #{_lambda_.1} parent=5 // pred_check_branch
        %1844 = sbr.rel (%p1842) target = $region194
      $region193: #{_lambda_.1} parent=5 // pred_region
        %s1845 = ssub.s32 %s24, 2
        // Predicated region
        $region195: #{_lambda_.1} parent=193 // pred_check
          %p1846 = pneg %p357
        $region196: #{_lambda_.1} parent=193 // pred_check_branch
          %1848 = sbr.rel (%p1846) target = $region198
        $region197: #{_lambda_.1} parent=193 // pred_region
          %s1849 = sand.u32 %s342, 1
          %s1850 = scalar_lea.sflag [#allocation9], %s1849
          %s1851 = sand.u32 %s342, 1
          %s1852 = smul.addr %s1851, 8
          %s1853 = scalar_lea.vmem [#allocation11], %s1852
          %1854 = dma.done %s1850, 128
        $region198: #{_lambda_.1} parent=193 // pred_fallthru
          _
      $region194: #{_lambda_.1} parent=5 // pred_fallthru
        _
    $region6: #{_lambda_.1} parent=1 // loop_footer
      %s28 = sadd.s32 1, %s24
    $region7: #{_lambda_.1} parent=1 // loop_footer_branch
      %23 = sbr.rel target = $region3
    $region8: #{_lambda_.1} parent=1 // loop_exit
      _
    %1855 = vsyncpa [#allocation9], 1
    %s1856 = scalar_lea.sflag [#allocation9], 1
    %1857 = vsyncpa %s1856, 1
    %1858 = vsyncpa [#allocation10], 1
    %s1859 = scalar_lea.sflag [#allocation10], 1
    %1860 = vsyncpa %s1859, 1

</llo_original>
